<compile_context>
chip_gen: v7x
topology: tpu7x:2x2x1
jax: 0.10.0
libtpu: 0.0.40
codegen_flags: <defaults>
</compile_context>

<pallas_src>
import functools

import jax
import jax.numpy as jnp
from jax import lax
from jax.experimental import pallas as pl
from jax.experimental.pallas import tpu as pltpu


def _supcon_row_kernel(feat_ref, lab_row_ref, lab_col_ref, inv_cnt_ref, out_ref,
                       *, inv_temp, block_rows, stabilize):
    """One tile of anchor rows vs. the full contrast set ('all' mode).

    feat_ref    : [N, Dp]        features (anchor == contrast), resident, single-buffered
    lab_row_ref : [TM, 1] int32  labels of this tile's anchor rows
    lab_col_ref : [1, N]  int32  labels of every contrast column, resident
    inv_cnt_ref : [1, TM] f32    1 / (#positives) per anchor row (0 where no positives)
    out_ref     : [1, TM] f32    per-anchor loss  (-mean_log_prob_pos), lane-dense
    """
    row0 = pl.multiple_of(pl.program_id(0) * block_rows, block_rows)

    a = feat_ref[pl.ds(row0, block_rows), :]          # [TM, Dp] slice of resident block
    c = feat_ref[...]                                 # [N,  Dp]

    # anchor_dot_contrast / temperature: MXU contraction on the feature dim
    # (no explicit transpose of the contrast operand), f32 accumulation.
    logits = lax.dot_general(
        a, c, dimension_numbers=(((1,), (1,)), ((), ())),
        preferred_element_type=jnp.float32) * inv_temp            # [TM, N]

    # Numerical stabilization. The per-row loss is shift-invariant, so any per-row
    # constant works; detach() in the PyTorch reference is a no-op in the forward.
    if stabilize:
        logits = logits - jnp.max(logits, axis=1, keepdims=True)
    else:
        # features are L2-normalized -> |raw logits| <= 1/temperature
        logits = logits - inv_temp

    # Self-contrast exclusion rebuilt from global row/col indices (no [N,N] input).
    row_ids = row0 + lax.broadcasted_iota(jnp.int32, logits.shape, 0)
    col_ids = lax.broadcasted_iota(jnp.int32, logits.shape, 1)
    not_self = row_ids != col_ids

    # Softmax denominator over all non-self contrast points.
    exp_logits = jnp.where(not_self, jnp.exp(logits), 0.0)
    log_denom = jnp.log(jnp.sum(exp_logits, axis=1))              # [TM]

    # Positives: same label AND not self. log_prob is never materialized:
    #   mean_pos(logits - log_denom) = sum_pos(logits) / cnt - log_denom
    positives = jnp.logical_and(lab_row_ref[...] == lab_col_ref[...], not_self)
    pos_logit_sum = jnp.sum(jnp.where(positives, logits, 0.0), axis=1)   # [TM]

    inv_cnt = inv_cnt_ref[0, :]                                   # [TM]
    valid = (inv_cnt > 0.0).astype(jnp.float32)                   # no-positive rows -> 0
    out_ref[0, :] = valid * log_denom - pos_logit_sum * inv_cnt


def _vmem_capacity_bytes():
    """Per-core VMEM capacity; falls back to the smallest current part (v7x, 64 MiB)."""
    try:
        return int(pltpu.get_tpu_info().vmem_capacity_bytes)
    except Exception:
        return 64 * 2**20


def _pick_block_rows(n, d_padded, feat_itemsize, budget_bytes):
    """Pick the anchor-row tile: MXU-sized (>=128), divides N, fits the VMEM budget.

    Never falls back below 128 rows (a tiny TM starves the MXU and multiplies the
    per-grid-step overhead); caps at ~N/2 so the 'parallel' row axis has at least
    two grid steps to share across TensorCores.
    """
    if n <= 128:
        return n
    cap = max(128, (n // 2) // 128 * 128)
    candidates = [r for r in range(cap, 127, -128) if n % r == 0]
    if not candidates:
        return n  # no clean multiple-of-128 tiling -> single full-extent tile
    resident = n * d_padded * feat_itemsize + 16 * n * 4   # single-buffered residents
    for r in candidates:
        tile_bytes = 6 * r * n * 4                         # live [TM, N] f32 temporaries
        if resident + tile_bytes <= budget_bytes:
            return r
    # TODO(synk): for very large N (resident [N, Dp] + one 128-row tile exceed VMEM)
    # add a second 'arbitrary' grid axis over contrast columns with an online-softmax
    # (running max / denominator / positive-sum in f32 scratch) instead of shrinking TM.
    return candidates[-1]


def supcon_loss(features, labels=None, temperature=0.07, block_rows=None,
                assume_normalized=False, matmul_dtype=None):
    """JAX/Pallas equivalent of SupConLoss(temperature, contrast_mode='all').forward.

    features: [bsz, n_views, dim] (or [bsz, n_views, ...]) float array
    labels:   optional [bsz] int array (None -> SimCLR / identity mask)
    assume_normalized: skip the per-row max (valid for L2-normalized features;
        the per-row loss is shift-invariant, so the result is identical).
    matmul_dtype: optionally cast the MXU operands (e.g. jnp.bfloat16, accuracy-gated);
        softmax math stays f32 either way.
    """
    if features.ndim < 3:
        raise ValueError('`features` needs to be [bsz, n_views, ...]')
    if features.ndim > 3:
        features = features.reshape(features.shape[0], features.shape[1], -1)
    # TODO(synk): only contrast_mode='all' with labels / labels=None is implemented;
    #             the explicit asymmetric [bsz, bsz] `mask` argument and the 'one' /
    #             'proxy' modes of the PyTorch module are not translated.

    bsz, n_views, dim = features.shape
    N = bsz * n_views

    # torch.cat(torch.unbind(features, dim=1), dim=0) -> view-major concatenation
    contrast_feature = jnp.transpose(features, (1, 0, 2)).reshape(N, dim)
    if matmul_dtype is not None:
        contrast_feature = contrast_feature.astype(matmul_dtype)

    # pad the contraction dim to a lane-dense multiple of 128 (zero padding is exact)
    d_pad = (-dim) % 128
    if d_pad:
        contrast_feature = jnp.pad(contrast_feature, ((0, 0), (0, d_pad)))
    Dp = dim + d_pad
    itemsize = contrast_feature.dtype.itemsize

    # effective integer labels (labels=None == SimCLR -> each sample its own class)
    if labels is None:
        eff = jnp.arange(bsz, dtype=jnp.int32)
    else:
        eff = labels.reshape(-1).astype(jnp.int32)
        if eff.shape[0] != bsz:
            raise ValueError('Num of labels does not match num of features')
    lab_vec = jnp.tile(eff, (n_views,))                 # [N], view-major order
    lab_row = lab_vec.reshape(N, 1)
    lab_col = lab_vec.reshape(1, N)

    # positives per anchor: (#same-label samples) * n_views - 1 (self excluded).
    # 1/pos_cnt is precomputed lane-dense and zero-guarded: anchors without any
    # positive (only possible for n_views == 1) contribute 0 loss instead of NaN.
    same = (eff.reshape(-1, 1) == eff.reshape(1, -1)).astype(jnp.float32)  # [bsz,bsz]
    pos_cnt = jnp.tile(jnp.sum(same, axis=1) * n_views - 1.0, (n_views,))  # [N]
    inv_cnt = jnp.where(pos_cnt > 0.0, 1.0 / jnp.maximum(pos_cnt, 1.0), 0.0)
    inv_cnt = inv_cnt.reshape(1, N).astype(jnp.float32)

    vmem_cap = _vmem_capacity_bytes()
    if block_rows is None:
        block_rows = _pick_block_rows(N, Dp, itemsize, int(0.6 * vmem_cap))
    if N % block_rows != 0:
        raise ValueError(f'block_rows={block_rows} must divide N={N}')
    if block_rows != N and block_rows % 128 != 0:
        raise ValueError('block_rows must equal N or be a multiple of 128 '
                         '(lane-dense output tile / MXU-sized anchor tile)')
    grid = (N // block_rows,)

    # VMEM implied by the chosen tiles: single-buffered resident feature block and
    # column labels, double-buffered small per-row blocks, live f32 temporaries.
    est = (N * Dp * itemsize + 8 * N * 4
           + 6 * block_rows * N * 4
           + 8 * 8 * block_rows * 4)
    vmem_limit = int(min(0.85 * vmem_cap, max(1.3 * est, 32 * 2**20)))

    kernel = functools.partial(_supcon_row_kernel,
                               inv_temp=1.0 / float(temperature),
                               block_rows=block_rows,
                               stabilize=not assume_normalized)

    per_anchor = pl.pallas_call(
        kernel,
        out_shape=jax.ShapeDtypeStruct((1, N), jnp.float32),
        grid=grid,
        in_specs=[
            # resident feature block: block index never changes -> single buffer
            pl.BlockSpec((N, Dp), lambda i: (0, 0),
                         pipeline_mode=pl.Buffered(buffer_count=1)),
            pl.BlockSpec((block_rows, 1), lambda i: (i, 0)),   # anchor-row labels
            pl.BlockSpec((1, N), lambda i: (0, 0),             # contrast-col labels
                         pipeline_mode=pl.Buffered(buffer_count=1)),
            pl.BlockSpec((1, block_rows), lambda i: (0, i)),   # 1/pos_cnt, lane-dense
        ],
        out_specs=pl.BlockSpec((1, block_rows), lambda i: (0, i)),
        compiler_params=pltpu.CompilerParams(
            dimension_semantics=("parallel",),
            vmem_limit_bytes=vmem_limit),
    )(contrast_feature, lab_row, lab_col, inv_cnt)

    # loss.view(anchor_count, batch_size).mean() == mean over all N anchors
    return jnp.mean(per_anchor)


def _supcon_loss_ref(features, labels=None, temperature=0.07):
    """Pure-JAX reference (mirrors the PyTorch forward, contrast_mode='all')."""
    bsz, n_views, dim = features.shape
    N = bsz * n_views
    contrast = jnp.transpose(features, (1, 0, 2)).reshape(N, dim)
    anchor = contrast
    if labels is None:
        base_mask = jnp.eye(bsz, dtype=jnp.float32)
    else:
        lab = labels.reshape(-1, 1)
        base_mask = (lab == lab.T).astype(jnp.float32)
    mask = jnp.tile(base_mask, (n_views, n_views))
    logits_mask = 1.0 - jnp.eye(N, dtype=jnp.float32)
    mask = mask * logits_mask
    logits_raw = (anchor @ contrast.T) / temperature
    logits = logits_raw - jnp.max(logits_raw, axis=1, keepdims=True)
    exp_logits = jnp.exp(logits) * logits_mask
    log_prob = logits - jnp.log(jnp.sum(exp_logits, axis=1, keepdims=True))
    mean_log_prob_pos = jnp.sum(mask * log_prob, axis=1) / jnp.sum(mask, axis=1)
    return jnp.mean(-mean_log_prob_pos)


if __name__ == "__main__":
    key = jax.random.PRNGKey(0)
    k_feat, k_lab, k_feat2, k_lab2 = jax.random.split(key, 4)

    # --- small shape: single full-extent tile (N = 64) ----------------------------
    bsz, n_views, dim = 32, 2, 32
    feats = jax.random.normal(k_feat, (bsz, n_views, dim), dtype=jnp.float32)
    feats = feats / jnp.linalg.norm(feats, axis=-1, keepdims=True)
    labels = jax.random.randint(k_lab, (bsz,), 0, 4)

    loss = jax.block_until_ready(supcon_loss(feats, labels=labels, temperature=0.07))
    ref = _supcon_loss_ref(feats, labels=labels, temperature=0.07)
    assert jnp.allclose(loss, ref, atol=1e-4, rtol=1e-4), (loss, ref)

    # normalized-features fast path (skips per-row max; shift-invariant -> same loss)
    loss_n = jax.block_until_ready(
        supcon_loss(feats, labels=labels, temperature=0.07, assume_normalized=True))
    assert jnp.allclose(loss_n, ref, atol=1e-4, rtol=1e-4), (loss_n, ref)

    # unsupervised (SimCLR) path: labels=None -> identity mask
    loss_u = jax.block_until_ready(supcon_loss(feats, labels=None, temperature=0.07))
    ref_u = _supcon_loss_ref(feats, labels=None, temperature=0.07)
    assert jnp.allclose(loss_u, ref_u, atol=1e-4, rtol=1e-4), (loss_u, ref_u)

    # --- larger shape: exercises the multi-step 'parallel' row grid ---------------
    #     N = 256, auto block_rows = 128, lane-dense (1, 128) output blocks
    bsz2, n_views2, dim2 = 128, 2, 32
    feats2 = jax.random.normal(k_feat2, (bsz2, n_views2, dim2), dtype=jnp.float32)
    feats2 = feats2 / jnp.linalg.norm(feats2, axis=-1, keepdims=True)
    labels2 = jax.random.randint(k_lab2, (bsz2,), 0, 10)

    loss2 = jax.block_until_ready(supcon_loss(feats2, labels=labels2, temperature=0.07))
    ref2 = _supcon_loss_ref(feats2, labels=labels2, temperature=0.07)
    assert jnp.allclose(loss2, ref2, atol=1e-4, rtol=1e-4), (loss2, ref2)

    print("KERNEL_OK")
</pallas_src>

<mosaic_0001>
module attributes {stable_mosaic.version = 11 : i64} {
  func.func @_supcon_row_kernel(%arg0: i32, %arg1: memref<64x128xf32, #tpu.memory_space<vmem>>, %arg2: memref<64x1xi32, #tpu.memory_space<vmem>>, %arg3: memref<1x64xi32, #tpu.memory_space<vmem>>, %arg4: memref<1x64xf32, #tpu.memory_space<vmem>>, %arg5: memref<1x64xf32, #tpu.memory_space<vmem>>) attributes {dimension_semantics = [#tpu.dimension_semantics<parallel>], iteration_bounds = array<i64: 1>, scalar_prefetch = 0 : i64, scratch_operands = 0 : i64, tpu.core_type = #tpu.core_type<tc>, window_params = [{pipeline_mode = #tpu.pipeline_mode<synchronous>, transform_indices = @transform_0, window_bounds = array<i64: 64, 128>}, {transform_indices = @transform_1, window_bounds = array<i64: 64, 1>}, {pipeline_mode = #tpu.pipeline_mode<synchronous>, transform_indices = @transform_2, window_bounds = array<i64: 1, 64>}, {transform_indices = @transform_3, window_bounds = array<i64: 1, 64>}, {transform_indices = @transform_4, window_bounds = array<i64: 1, 64>}]} {
    %c64_i32 = arith.constant 64 : i32
    %0 = arith.muli %arg0, %c64_i32 : i32
    %1 = tpu.assume_multiple %0, 64 : i32
    %2 = arith.index_cast %1 : i32 to index
    %c0 = arith.constant 0 : index
    %3 = vector.load %arg1[%2, %c0] : memref<64x128xf32, #tpu.memory_space<vmem>>, vector<64x128xf32>
    %c0_0 = arith.constant 0 : index
    %c0_1 = arith.constant 0 : index
    %4 = vector.load %arg1[%c0_0, %c0_1] : memref<64x128xf32, #tpu.memory_space<vmem>>, vector<64x128xf32>
    %cst = arith.constant dense<0.000000e+00> : vector<64x64xf32>
    %5 = tpu.matmul %3, %4, %cst {dimension_numbers = #tpu.dot_dimension_numbers<[1], [1], [0], [0], [0, 0, 1, 0], [], []>} : vector<64x128xf32>, vector<64x128xf32>, vector<64x64xf32> -> vector<64x64xf32>
    %cst_2 = arith.constant 14.2857141 : f32
    %6 = vector.broadcast %cst_2 : f32 to vector<64x64xf32>
    %7 = arith.mulf %5, %6 : vector<64x64xf32>
    %cst_3 = arith.constant dense<0xFF800000> : vector<64xf32>
    %8 = vector.multi_reduction <maximumf>, %7, %cst_3 [1] : vector<64x64xf32> to vector<64xf32>
    %9 = vector.shape_cast %8 : vector<64xf32> to vector<64x1xf32>
    %10 = vector.broadcast %9 : vector<64x1xf32> to vector<64x64xf32>
    %11 = arith.subf %7, %10 : vector<64x64xf32>
    %12 = tpu.iota {dimensions = array<i32: 0>} : vector<64x64xi32>
    %13 = vector.broadcast %1 : i32 to vector<64x64xi32>
    %14 = arith.addi %13, %12 : vector<64x64xi32>
    %15 = tpu.iota {dimensions = array<i32: 1>} : vector<64x64xi32>
    %16 = arith.cmpi ne, %14, %15 : vector<64x64xi32>
    %17 = math.exp %11 : vector<64x64xf32>
    %cst_4 = arith.constant 0.000000e+00 : f32
    %18 = vector.broadcast %cst_4 : f32 to vector<64x64xf32>
    %19 = arith.select %16, %17, %18 : vector<64x64xi1>, vector<64x64xf32>
    %cst_5 = arith.constant dense<0.000000e+00> : vector<64xf32>
    %20 = vector.multi_reduction <add>, %19, %cst_5 [1] : vector<64x64xf32> to vector<64xf32>
    %21 = math.log %20 : vector<64xf32>
    %c0_6 = arith.constant 0 : index
    %c0_7 = arith.constant 0 : index
    %22 = vector.load %arg2[%c0_6, %c0_7] : memref<64x1xi32, #tpu.memory_space<vmem>>, vector<64x1xi32>
    %c0_8 = arith.constant 0 : index
    %c0_9 = arith.constant 0 : index
    %23 = vector.load %arg3[%c0_8, %c0_9] : memref<1x64xi32, #tpu.memory_space<vmem>>, vector<1x64xi32>
    %24 = vector.broadcast %22 : vector<64x1xi32> to vector<64x64xi32>
    %25 = vector.broadcast %23 : vector<1x64xi32> to vector<64x64xi32>
    %26 = arith.cmpi eq, %24, %25 : vector<64x64xi32>
    %27 = arith.andi %26, %16 : vector<64x64xi1>
    %cst_10 = arith.constant 0.000000e+00 : f32
    %28 = vector.broadcast %cst_10 : f32 to vector<64x64xf32>
    %29 = arith.select %27, %11, %28 : vector<64x64xi1>, vector<64x64xf32>
    %cst_11 = arith.constant dense<0.000000e+00> : vector<64xf32>
    %30 = vector.multi_reduction <add>, %29, %cst_11 [1] : vector<64x64xf32> to vector<64xf32>
    %c0_12 = arith.constant 0 : index
    %c0_13 = arith.constant 0 : index
    %31 = vector.load %arg4[%c0_12, %c0_13] : memref<1x64xf32, #tpu.memory_space<vmem>>, vector<1x64xf32>
    %32 = vector.shape_cast %31 : vector<1x64xf32> to vector<64xf32>
    %cst_14 = arith.constant 0.000000e+00 : f32
    %33 = vector.broadcast %cst_14 : f32 to vector<64xf32>
    %34 = arith.cmpf ogt, %32, %33 : vector<64xf32>
    %35 = arith.extui %34 : vector<64xi1> to vector<64xi32>
    %36 = arith.sitofp %35 : vector<64xi32> to vector<64xf32>
    %37 = arith.mulf %36, %21 : vector<64xf32>
    %38 = arith.mulf %30, %32 : vector<64xf32>
    %39 = arith.subf %37, %38 : vector<64xf32>
    %c0_15 = arith.constant 0 : index
    %c0_16 = arith.constant 0 : index
    %40 = vector.load %arg5[%c0_15, %c0_16] : memref<1x64xf32, #tpu.memory_space<vmem>>, vector<1x64xf32>
    %41 = vector.shape_cast %40 : vector<1x64xf32> to vector<64xf32>
    %42 = vector.shape_cast %39 : vector<64xf32> to vector<1x64xf32>
    tpu.vector_store %arg5[%c0_15, %c0_16], %42 {strides = array<i32>} : memref<1x64xf32, #tpu.memory_space<vmem>>, vector<1x64xf32>,
    return
  }
  func.func @transform_0(%arg0: i32) -> (i32, i32) {
    %c0_i32 = arith.constant 0 : i32
    %c0_i32_0 = arith.constant 0 : i32
    %c0_i32_1 = arith.constant 0 : i32
    return %c0_i32, %c0_i32_0 : i32, i32
  }
  func.func @transform_1(%arg0: i32) -> (i32, i32) {
    %c0_i32 = arith.constant 0 : i32
    %c0_i32_0 = arith.constant 0 : i32
    return %arg0, %c0_i32 : i32, i32
  }
  func.func @transform_2(%arg0: i32) -> (i32, i32) {
    %c0_i32 = arith.constant 0 : i32
    %c0_i32_0 = arith.constant 0 : i32
    %c0_i32_1 = arith.constant 0 : i32
    return %c0_i32, %c0_i32_0 : i32, i32
  }
  func.func @transform_3(%arg0: i32) -> (i32, i32) {
    %c0_i32 = arith.constant 0 : i32
    %c0_i32_0 = arith.constant 0 : i32
    return %c0_i32, %arg0 : i32, i32
  }
  func.func @transform_4(%arg0: i32) -> (i32, i32) {
    %c0_i32 = arith.constant 0 : i32
    %c0_i32_0 = arith.constant 0 : i32
    return %c0_i32, %arg0 : i32, i32
  }
}

</mosaic_0001>

<llo_original>
// kernel: tpu_custom_call.1
$region0: #{tpu_custom_call.1}
  #allocation0 [shape = 'u32[]', space=smem, size = 0x4, offset = 0x4, fixed_abs, tag = 'smem constant byte address 0x4 - core index']
  #allocation1 [shape = 'u32[144,128]{1,0:T(1,128)}', space=vmem, size = 0x12000, scoped, tag = 'internal scratch']
  %s0 = inlined_call_operand.vmem [shape: f32[64,128], index: 0, kind: input, shape index: {}]
  %s1 = inlined_call_operand.vmem [shape: s32[64,1], index: 1, kind: input, shape index: {}]
  %s2 = inlined_call_operand.vmem [shape: s32[1,64], index: 2, kind: input, shape index: {}]
  %s3 = inlined_call_operand.vmem [shape: f32[1,64], index: 3, kind: input, shape index: {}]
  %s4 = inlined_call_operand.hbm [shape: f32[1,64], index: 4, kind: output, shape index: {}]
  %s5 = sld [smem:[#allocation0]]
  $region26: #{tpu_custom_call.1} parent=0
    _
  %s7 = ssub.s32 1, %s5
  %s8 = scalar_select 0, %s7, %s5
  $region1: #{tpu_custom_call.1} parent=0
    #allocation2 [shape = 'u8[512]{0}', space=vmem, size = 0x400, scoped, tag = 'output window, operand 0, single buffered']
    #allocation3 [shape = 's32[1]{0}', space=sflag, size = 0x4, scoped, tag = 'scoped memory for tpu_custom_call.1']
    %9 = vsyncpa [#allocation3], 0
    // Predicated region
    $region2: #{tpu_custom_call.1} parent=1 // pred_check
      _
    $region3: #{tpu_custom_call.1} parent=1 // pred_check_branch
      %11 = sbr.rel (0) target = $region5
    $region4: #{tpu_custom_call.1} parent=1 // pred_region
      _
    $region5: #{tpu_custom_call.1} parent=1 // pred_fallthru
      _
    // Predicated region
    $region6: #{tpu_custom_call.1} parent=1 // pred_check
      _
    $region7: #{tpu_custom_call.1} parent=1 // pred_check_branch
      %13 = sbr.rel (0) target = $region9
    $region8: #{tpu_custom_call.1} parent=1 // pred_region
      _
    $region9: #{tpu_custom_call.1} parent=1 // pred_fallthru
      _
    // Predicated region
    $region10: #{tpu_custom_call.1} parent=1 // pred_check
      _
    $region11: #{tpu_custom_call.1} parent=1 // pred_check_branch
      %15 = sbr.rel (0) target = $region13
    $region12: #{tpu_custom_call.1} parent=1 // pred_region
      _
    $region13: #{tpu_custom_call.1} parent=1 // pred_fallthru
      _
    // Predicated region
    $region14: #{tpu_custom_call.1} parent=1 // pred_check
      _
    $region15: #{tpu_custom_call.1} parent=1 // pred_check_branch
      %17 = sbr.rel (0) target = $region17
    $region16: #{tpu_custom_call.1} parent=1 // pred_region
      _
    $region17: #{tpu_custom_call.1} parent=1 // pred_fallthru
      _
    %s18 = smul.u32 0, 64
    %s19 = scalar_lea.vmem %s0, %s18
    %v20 = vld [vmem:[%s19] sm:$0xff]
    %v21 = vld [vmem:[%s19 + $0x8] sm:$0xff]
    %v22 = vld [vmem:[%s19 + $0x10] sm:$0xff]
    %v23 = vld [vmem:[%s19 + $0x18] sm:$0xff]
    %v24 = vld [vmem:[%s19 + $0x20] sm:$0xff]
    %v25 = vld [vmem:[%s19 + $0x28] sm:$0xff]
    %v26 = vld [vmem:[%s19 + $0x30] sm:$0xff]
    %v27 = vld [vmem:[%s19 + $0x38] sm:$0xff]
    %v28 = vld [vmem:[%s0] sm:$0xff]
    %v29 = vld [vmem:[%s0 + $0x8] sm:$0xff]
    %v30 = vld [vmem:[%s0 + $0x10] sm:$0xff]
    %v31 = vld [vmem:[%s0 + $0x18] sm:$0xff]
    %v32 = vld [vmem:[%s0 + $0x20] sm:$0xff]
    %v33 = vld [vmem:[%s0 + $0x28] sm:$0xff]
    %v34 = vld [vmem:[%s0 + $0x30] sm:$0xff]
    %v35 = vld [vmem:[%s0 + $0x38] sm:$0xff]
    %36 = vmatprep.subr.mxu0 0.0
    %37 = vmatpush1.xpose.msra.mxu0 %v28
    %38 = vmatprep.subr.mxu0 0.0
    %39 = vmatpush1.xpose.msra.mxu0 %v29
    %40 = vmatprep.subr.mxu0 0.0
    %41 = vmatpush1.xpose.msra.mxu0 %v30
    %42 = vmatprep.subr.mxu0 0.0
    %43 = vmatpush1.xpose.msra.mxu0 %v31
    %44 = vmatprep.subr.mxu0 0.0
    %45 = vmatpush1.xpose.msra.mxu0 %v32
    %46 = vmatprep.subr.mxu0 0.0
    %47 = vmatpush1.xpose.msra.mxu0 %v33
    %48 = vmatprep.subr.mxu0 0.0
    %49 = vmatpush1.xpose.msra.mxu0 %v34
    %50 = vmatprep.subr.mxu0 0.0
    %51 = vmatpush1.xpose.msra.mxu0 %v35
    %52 = vmatprep.subr.mxu0 0.0
    %53 = vmatpush1.xpose.msra.mxu0 0.0
    %54 = vmatprep.subr.mxu0 0.0
    %55 = vmatpush1.xpose.msra.mxu0 0.0
    %56 = vmatprep.subr.mxu0 0.0
    %57 = vmatpush1.xpose.msra.mxu0 0.0
    %58 = vmatprep.subr.mxu0 0.0
    %59 = vmatpush1.xpose.msra.mxu0 0.0
    %60 = vmatprep.subr.mxu0 0.0
    %61 = vmatpush1.xpose.msra.mxu0 0.0
    %62 = vmatprep.subr.mxu0 0.0
    %63 = vmatpush1.xpose.msra.mxu0 0.0
    %64 = vmatprep.subr.mxu0 0.0
    %65 = vmatpush1.xpose.msra.mxu0 0.0
    %66 = vmatprep.subr.mxu0 0.0
    %67 = vmatpush1.xpose.msra.mxu0 0.0
    %68 = vmatprep.subr.mxu0 0.0
    %69 = vmatpush1.xpose.msra.mxu0 0.0
    %70 = vmatprep.subr.mxu0 0.0
    %71 = vmatpush1.xpose.msra.mxu0 0.0
    %72 = vmatprep.subr.mxu0 0.0
    %73 = vmatpush1.xpose.msra.mxu0 0.0
    %74 = vmatprep.subr.mxu0 0.0
    %75 = vmatpush1.xpose.msra.mxu0 0.0
    %76 = vmatprep.subr.mxu0 0.0
    %77 = vmatpush1.xpose.msra.mxu0 0.0
    %78 = vmatprep.subr.mxu0 0.0
    %79 = vmatpush1.xpose.msra.mxu0 0.0
    %80 = vmatprep.subr.mxu0 0.0
    %81 = vmatpush1.xpose.msra.mxu0 0.0
    %82 = vmatprep.subr.mxu0 0.0
    %83 = vmatpush1.xpose.msra.mxu0 0.0
    %84 = vmatprep.subr.mxu0 0.0
    %85 = vmatpush1.xpose.msra.mxu0 0.0
    %86 = vmatprep.subr.mxu0 0.0
    %87 = vmatpush1.xpose.msra.mxu0 0.0
    %88 = vmatprep.subr.mxu0 0.0
    %89 = vmatpush1.xpose.msra.mxu0 0.0
    %90 = vmatprep.subr.mxu0 0.0
    %91 = vmatpush1.xpose.msra.mxu0 0.0
    %92 = vmatprep.subr.mxu0 0.0
    %93 = vmatpush1.xpose.msra.mxu0 0.0
    %94 = vmatprep.subr.mxu0 0.0
    %95 = vmatpush1.xpose.msra.mxu0 0.0
    %96 = vmatprep.subr.mxu0 0.0
    %97 = vmatpush1.xpose.msra.mxu0 0.0
    %98 = vmatprep.subr.mxu0 0.0
    %99 = vmatpush1.xpose.msra.mxu0 0.0
    %100 = vmatprep.mubr.f32.mxu0 0.0
    %101 = vmatmul.mubr.f32.gmra.mrb[0].mxu0 %v20
    %v102 = vpop.f32.mrb[0].mxu0
    %v103 = vadd.f32 0.0, %v102
    %v104 = vpop.f32.mrb[0].mxu0
    %105 = vmatprep.mubr.f32.mxu0 0.0
    %106 = vmatmul.mubr.f32.gmra.mrb[0].mxu0 %v21
    %v107 = vpop.f32.mrb[0].mxu0
    %v108 = vadd.f32 0.0, %v107
    %v109 = vpop.f32.mrb[0].mxu0
    %110 = vmatprep.mubr.f32.mxu0 0.0
    %111 = vmatmul.mubr.f32.gmra.mrb[0].mxu0 %v22
    %v112 = vpop.f32.mrb[0].mxu0
    %v113 = vadd.f32 0.0, %v112
    %v114 = vpop.f32.mrb[0].mxu0
    %115 = vmatprep.mubr.f32.mxu0 0.0
    %116 = vmatmul.mubr.f32.gmra.mrb[0].mxu0 %v23
    %v117 = vpop.f32.mrb[0].mxu0
    %v118 = vadd.f32 0.0, %v117
    %v119 = vpop.f32.mrb[0].mxu0
    %120 = vmatprep.mubr.f32.mxu0 0.0
    %121 = vmatmul.mubr.f32.gmra.mrb[0].mxu0 %v24
    %v122 = vpop.f32.mrb[0].mxu0
    %v123 = vadd.f32 0.0, %v122
    %v124 = vpop.f32.mrb[0].mxu0
    %125 = vmatprep.mubr.f32.mxu0 0.0
    %126 = vmatmul.mubr.f32.gmra.mrb[0].mxu0 %v25
    %v127 = vpop.f32.mrb[0].mxu0
    %v128 = vadd.f32 0.0, %v127
    %v129 = vpop.f32.mrb[0].mxu0
    %130 = vmatprep.mubr.f32.mxu0 0.0
    %131 = vmatmul.mubr.f32.gmra.mrb[0].mxu0 %v26
    %v132 = vpop.f32.mrb[0].mxu0
    %v133 = vadd.f32 0.0, %v132
    %v134 = vpop.f32.mrb[0].mxu0
    %135 = vmatprep.mubr.f32.mxu0 0.0
    %136 = vmatmul.mubr.f32.gmra.mrb[0].mxu0 %v27
    %v137 = vpop.f32.mrb[0].mxu0
    %v138 = vadd.f32 0.0, %v137
    %v139 = vpop.f32.mrb[0].mxu0
    %140 = vdwg.mxu0
    %v141 = vmul.f32 %v103, 14.285714
    %v142 = vmul.f32 %v108, 14.285714
    %v143 = vmul.f32 %v113, 14.285714
    %v144 = vmul.f32 %v118, 14.285714
    %v145 = vmul.f32 %v123, 14.285714
    %v146 = vmul.f32 %v128, 14.285714
    %v147 = vmul.f32 %v133, 14.285714
    %v148 = vmul.f32 %v138, 14.285714
    %vm149 = vcmask 523264
    %v150 = vsel %vm149, %v141, -inf
    %151 = vmax.xlane.f32.xlu0 %v150
    %v152 = vpop.xlane.xlu0 %151
    %v153 = vsel %vm149, %v142, -inf
    %154 = vmax.xlane.f32.xlu0 %v153
    %v155 = vpop.xlane.xlu0 %154
    %v156 = vsel %vm149, %v143, -inf
    %157 = vmax.xlane.f32.xlu0 %v156
    %v158 = vpop.xlane.xlu0 %157
    %v159 = vsel %vm149, %v144, -inf
    %160 = vmax.xlane.f32.xlu0 %v159
    %v161 = vpop.xlane.xlu0 %160
    %v162 = vsel %vm149, %v145, -inf
    %163 = vmax.xlane.f32.xlu0 %v162
    %v164 = vpop.xlane.xlu0 %163
    %v165 = vsel %vm149, %v146, -inf
    %166 = vmax.xlane.f32.xlu0 %v165
    %v167 = vpop.xlane.xlu0 %166
    %v168 = vsel %vm149, %v147, -inf
    %169 = vmax.xlane.f32.xlu0 %v168
    %v170 = vpop.xlane.xlu0 %169
    %v171 = vsel %vm149, %v148, -inf
    %172 = vmax.xlane.f32.xlu0 %v171
    %v173 = vpop.xlane.xlu0 %172
    %v174 = vsub.f32 %v141, %v152
    %v175 = vsub.f32 %v142, %v155
    %v176 = vsub.f32 %v143, %v158
    %v177 = vsub.f32 %v144, %v161
    %v178 = vsub.f32 %v145, %v164
    %v179 = vsub.f32 %v146, %v167
    %v180 = vsub.f32 %v147, %v170
    %v181 = vsub.f32 %v148, %v173
    %v182 = vlaneseq
    %v183 = vshrl.u32 %v182, 7
    %v184 = vadd.s32 %v183, 8
    %v185 = vadd.s32 %v183, 16
    %v186 = vadd.s32 %v183, 24
    %v187 = vadd.s32 %v183, 32
    %v188 = vadd.s32 %v183, 40
    %v189 = vadd.s32 %v183, 48
    %v190 = vadd.s32 %v183, 56
    %v191 = vstv %s18
    %v192 = vadd.s32 %v191, %v183
    %v193 = vadd.s32 %v191, %v184
    %v194 = vadd.s32 %v191, %v185
    %v195 = vadd.s32 %v191, %v186
    %v196 = vadd.s32 %v191, %v187
    %v197 = vadd.s32 %v191, %v188
    %v198 = vadd.s32 %v191, %v189
    %v199 = vadd.s32 %v191, %v190
    %v200 = vlaneseq
    %v201 = vand.u32 %v200, 127
    %vm202 = vcmp.ne.s32.totalorder %v192, %v201
    %vm203 = vcmp.ne.s32.totalorder %v193, %v201
    %vm204 = vcmp.ne.s32.totalorder %v194, %v201
    %vm205 = vcmp.ne.s32.totalorder %v195, %v201
    %vm206 = vcmp.ne.s32.totalorder %v196, %v201
    %vm207 = vcmp.ne.s32.totalorder %v197, %v201
    %vm208 = vcmp.ne.s32.totalorder %v198, %v201
    %vm209 = vcmp.ne.s32.totalorder %v199, %v201
    %v210 = vmul.f32 %v174, 1.442695
    %v211 = vpow.pop %v210
    %v212 = vmul.f32 %v175, 1.442695
    %v213 = vpow.pop %v212
    %v214 = vmul.f32 %v176, 1.442695
    %v215 = vpow.pop %v214
    %v216 = vmul.f32 %v177, 1.442695
    %v217 = vpow.pop %v216
    %v218 = vmul.f32 %v178, 1.442695
    %v219 = vpow.pop %v218
    %v220 = vmul.f32 %v179, 1.442695
    %v221 = vpow.pop %v220
    %v222 = vmul.f32 %v180, 1.442695
    %v223 = vpow.pop %v222
    %v224 = vmul.f32 %v181, 1.442695
    %v225 = vpow.pop %v224
    %v226 = vsel %vm202, %v211, 0.0
    %v227 = vsel %vm203, %v213, 0.0
    %v228 = vsel %vm204, %v215, 0.0
    %v229 = vsel %vm205, %v217, 0.0
    %v230 = vsel %vm206, %v219, 0.0
    %v231 = vsel %vm207, %v221, 0.0
    %v232 = vsel %vm208, %v223, 0.0
    %v233 = vsel %vm209, %v225, 0.0
    %v234 = vsel %vm149, %v226, 0.0
    %235 = vadd.xlane.f32.xlu0 %v234
    %v236 = vpop.xlane.xlu0 %235
    %v237 = vsel %vm149, %v227, 0.0
    %238 = vadd.xlane.f32.xlu0 %v237
    %v239 = vpop.xlane.xlu0 %238
    %v240 = vsel %vm149, %v228, 0.0
    %241 = vadd.xlane.f32.xlu0 %v240
    %v242 = vpop.xlane.xlu0 %241
    %v243 = vsel %vm149, %v229, 0.0
    %244 = vadd.xlane.f32.xlu0 %v243
    %v245 = vpop.xlane.xlu0 %244
    %v246 = vsel %vm149, %v230, 0.0
    %247 = vadd.xlane.f32.xlu0 %v246
    %v248 = vpop.xlane.xlu0 %247
    %v249 = vsel %vm149, %v231, 0.0
    %250 = vadd.xlane.f32.xlu0 %v249
    %v251 = vpop.xlane.xlu0 %250
    %v252 = vsel %vm149, %v232, 0.0
    %253 = vadd.xlane.f32.xlu0 %v252
    %v254 = vpop.xlane.xlu0 %253
    %v255 = vsel %vm149, %v233, 0.0
    %256 = vadd.xlane.f32.xlu0 %v255
    %v257 = vpop.xlane.xlu0 %256
    %v258 = vlog2.pop %v236
    %v259 = vmul.f32 %v258, 0.6931472
    %v260 = vlog2.pop %v239
    %v261 = vmul.f32 %v260, 0.6931472
    %v262 = vlog2.pop %v242
    %v263 = vmul.f32 %v262, 0.6931472
    %v264 = vlog2.pop %v245
    %v265 = vmul.f32 %v264, 0.6931472
    %v266 = vlog2.pop %v248
    %v267 = vmul.f32 %v266, 0.6931472
    %v268 = vlog2.pop %v251
    %v269 = vmul.f32 %v268, 0.6931472
    %v270 = vlog2.pop %v254
    %v271 = vmul.f32 %v270, 0.6931472
    %v272 = vlog2.pop %v257
    %v273 = vmul.f32 %v272, 0.6931472
    %v274 = vld [vmem:[%s1] sm:$0xff]
    %v275 = vld [vmem:[%s1 + $0x8] sm:$0xff]
    %v276 = vld [vmem:[%s1 + $0x10] sm:$0xff]
    %v277 = vld [vmem:[%s1 + $0x18] sm:$0xff]
    %v278 = vld [vmem:[%s1 + $0x20] sm:$0xff]
    %v279 = vld [vmem:[%s1 + $0x28] sm:$0xff]
    %v280 = vld [vmem:[%s1 + $0x30] sm:$0xff]
    %v281 = vld [vmem:[%s1 + $0x38] sm:$0xff]
    %v282 = vld [vmem:[%s2] sm:$0x1]
    %283 = vset.pattern.permute.xlu0 0
    %284 = vperm.xlu0 %283, %v274
    %v285 = vpop.permute.xlu0 %284
    %286 = vset.pattern.permute.xlu0 0
    %287 = vperm.xlu0 %286, %v275
    %v288 = vpop.permute.xlu0 %287
    %289 = vset.pattern.permute.xlu0 0
    %290 = vperm.xlu0 %289, %v276
    %v291 = vpop.permute.xlu0 %290
    %292 = vset.pattern.permute.xlu0 0
    %293 = vperm.xlu0 %292, %v277
    %v294 = vpop.permute.xlu0 %293
    %295 = vset.pattern.permute.xlu0 0
    %296 = vperm.xlu0 %295, %v278
    %v297 = vpop.permute.xlu0 %296
    %298 = vset.pattern.permute.xlu0 0
    %299 = vperm.xlu0 %298, %v279
    %v300 = vpop.permute.xlu0 %299
    %301 = vset.pattern.permute.xlu0 0
    %302 = vperm.xlu0 %301, %v280
    %v303 = vpop.permute.xlu0 %302
    %304 = vset.pattern.permute.xlu0 0
    %305 = vperm.xlu0 %304, %v281
    %v306 = vpop.permute.xlu0 %305
    %v307 = vlaneseq
    %v308 = vshrl.u32 %v307, 7
    %v309 = vsub.s32 0, %v308
    %v310 = vrot.slane %v282, %v309
    %vm311 = vcmp.eq.s32.totalorder %v285, %v310
    %vm312 = vcmp.eq.s32.totalorder %v288, %v310
    %vm313 = vcmp.eq.s32.totalorder %v291, %v310
    %vm314 = vcmp.eq.s32.totalorder %v294, %v310
    %vm315 = vcmp.eq.s32.totalorder %v297, %v310
    %vm316 = vcmp.eq.s32.totalorder %v300, %v310
    %vm317 = vcmp.eq.s32.totalorder %v303, %v310
    %vm318 = vcmp.eq.s32.totalorder %v306, %v310
    %vm319 = vmand %vm311, %vm202
    %vm320 = vmand %vm312, %vm203
    %vm321 = vmand %vm313, %vm204
    %vm322 = vmand %vm314, %vm205
    %vm323 = vmand %vm315, %vm206
    %vm324 = vmand %vm316, %vm207
    %vm325 = vmand %vm317, %vm208
    %vm326 = vmand %vm318, %vm209
    %v327 = vsel %vm319, %v174, 0.0
    %v328 = vsel %vm320, %v175, 0.0
    %v329 = vsel %vm321, %v176, 0.0
    %v330 = vsel %vm322, %v177, 0.0
    %v331 = vsel %vm323, %v178, 0.0
    %v332 = vsel %vm324, %v179, 0.0
    %v333 = vsel %vm325, %v180, 0.0
    %v334 = vsel %vm326, %v181, 0.0
    %v335 = vsel %vm149, %v327, 0.0
    %336 = vadd.xlane.f32.xlu0 %v335
    %v337 = vpop.xlane.xlu0 %336
    %v338 = vsel %vm149, %v328, 0.0
    %339 = vadd.xlane.f32.xlu0 %v338
    %v340 = vpop.xlane.xlu0 %339
    %v341 = vsel %vm149, %v329, 0.0
    %342 = vadd.xlane.f32.xlu0 %v341
    %v343 = vpop.xlane.xlu0 %342
    %v344 = vsel %vm149, %v330, 0.0
    %345 = vadd.xlane.f32.xlu0 %v344
    %v346 = vpop.xlane.xlu0 %345
    %v347 = vsel %vm149, %v331, 0.0
    %348 = vadd.xlane.f32.xlu0 %v347
    %v349 = vpop.xlane.xlu0 %348
    %v350 = vsel %vm149, %v332, 0.0
    %351 = vadd.xlane.f32.xlu0 %v350
    %v352 = vpop.xlane.xlu0 %351
    %v353 = vsel %vm149, %v333, 0.0
    %354 = vadd.xlane.f32.xlu0 %v353
    %v355 = vpop.xlane.xlu0 %354
    %v356 = vsel %vm149, %v334, 0.0
    %357 = vadd.xlane.f32.xlu0 %v356
    %v358 = vpop.xlane.xlu0 %357
    %v359 = vld [vmem:[%s3] sm:$0x1]
    %vm360 = vcmp.gt.f32.partialorder %v359, 0.0
    %v361 = vsel %vm360, 1, 0
    %v362 = vcvt.s32.f32 %v361
    %v371 = vlaneseq
    %v372 = vshrl.u32 %v371, 7
    %v373 = vsub.s32 0, %v372
    %v374 = vrot.slane %v259, %v373
    %v375 = vlaneseq
    %v376 = vshrl.u32 %v375, 7
    %v377 = vsub.s32 1, %v376
    %v378 = vrot.slane %v259, %v377
    %v379 = vlaneseq
    %v380 = vshrl.u32 %v379, 7
    %v381 = vsub.s32 2, %v380
    %v382 = vrot.slane %v259, %v381
    %v383 = vlaneseq
    %v384 = vshrl.u32 %v383, 7
    %v385 = vsub.s32 3, %v384
    %v386 = vrot.slane %v259, %v385
    %v387 = vlaneseq
    %v388 = vshrl.u32 %v387, 7
    %v389 = vsub.s32 4, %v388
    %v390 = vrot.slane %v259, %v389
    %v391 = vlaneseq
    %v392 = vshrl.u32 %v391, 7
    %v393 = vsub.s32 5, %v392
    %v394 = vrot.slane %v259, %v393
    %v395 = vlaneseq
    %v396 = vshrl.u32 %v395, 7
    %v397 = vsub.s32 6, %v396
    %v398 = vrot.slane %v259, %v397
    %v399 = vlaneseq
    %v400 = vshrl.u32 %v399, 7
    %v401 = vsub.s32 7, %v400
    %v402 = vrot.slane %v259, %v401
    %v403 = vlaneseq
    %v404 = vshrl.u32 %v403, 7
    %v405 = vsub.s32 0, %v404
    %v406 = vrot.slane %v261, %v405
    %v407 = vlaneseq
    %v408 = vshrl.u32 %v407, 7
    %v409 = vsub.s32 1, %v408
    %v410 = vrot.slane %v261, %v409
    %v411 = vlaneseq
    %v412 = vshrl.u32 %v411, 7
    %v413 = vsub.s32 2, %v412
    %v414 = vrot.slane %v261, %v413
    %v415 = vlaneseq
    %v416 = vshrl.u32 %v415, 7
    %v417 = vsub.s32 3, %v416
    %v418 = vrot.slane %v261, %v417
    %v419 = vlaneseq
    %v420 = vshrl.u32 %v419, 7
    %v421 = vsub.s32 4, %v420
    %v422 = vrot.slane %v261, %v421
    %v423 = vlaneseq
    %v424 = vshrl.u32 %v423, 7
    %v425 = vsub.s32 5, %v424
    %v426 = vrot.slane %v261, %v425
    %v427 = vlaneseq
    %v428 = vshrl.u32 %v427, 7
    %v429 = vsub.s32 6, %v428
    %v430 = vrot.slane %v261, %v429
    %v431 = vlaneseq
    %v432 = vshrl.u32 %v431, 7
    %v433 = vsub.s32 7, %v432
    %v434 = vrot.slane %v261, %v433
    %v435 = vlaneseq
    %v436 = vshrl.u32 %v435, 7
    %v437 = vsub.s32 0, %v436
    %v438 = vrot.slane %v263, %v437
    %v439 = vlaneseq
    %v440 = vshrl.u32 %v439, 7
    %v441 = vsub.s32 1, %v440
    %v442 = vrot.slane %v263, %v441
    %v443 = vlaneseq
    %v444 = vshrl.u32 %v443, 7
    %v445 = vsub.s32 2, %v444
    %v446 = vrot.slane %v263, %v445
    %v447 = vlaneseq
    %v448 = vshrl.u32 %v447, 7
    %v449 = vsub.s32 3, %v448
    %v450 = vrot.slane %v263, %v449
    %v451 = vlaneseq
    %v452 = vshrl.u32 %v451, 7
    %v453 = vsub.s32 4, %v452
    %v454 = vrot.slane %v263, %v453
    %v455 = vlaneseq
    %v456 = vshrl.u32 %v455, 7
    %v457 = vsub.s32 5, %v456
    %v458 = vrot.slane %v263, %v457
    %v459 = vlaneseq
    %v460 = vshrl.u32 %v459, 7
    %v461 = vsub.s32 6, %v460
    %v462 = vrot.slane %v263, %v461
    %v463 = vlaneseq
    %v464 = vshrl.u32 %v463, 7
    %v465 = vsub.s32 7, %v464
    %v466 = vrot.slane %v263, %v465
    %v467 = vlaneseq
    %v468 = vshrl.u32 %v467, 7
    %v469 = vsub.s32 0, %v468
    %v470 = vrot.slane %v265, %v469
    %v471 = vlaneseq
    %v472 = vshrl.u32 %v471, 7
    %v473 = vsub.s32 1, %v472
    %v474 = vrot.slane %v265, %v473
    %v475 = vlaneseq
    %v476 = vshrl.u32 %v475, 7
    %v477 = vsub.s32 2, %v476
    %v478 = vrot.slane %v265, %v477
    %v479 = vlaneseq
    %v480 = vshrl.u32 %v479, 7
    %v481 = vsub.s32 3, %v480
    %v482 = vrot.slane %v265, %v481
    %v483 = vlaneseq
    %v484 = vshrl.u32 %v483, 7
    %v485 = vsub.s32 4, %v484
    %v486 = vrot.slane %v265, %v485
    %v487 = vlaneseq
    %v488 = vshrl.u32 %v487, 7
    %v489 = vsub.s32 5, %v488
    %v490 = vrot.slane %v265, %v489
    %v491 = vlaneseq
    %v492 = vshrl.u32 %v491, 7
    %v493 = vsub.s32 6, %v492
    %v494 = vrot.slane %v265, %v493
    %v495 = vlaneseq
    %v496 = vshrl.u32 %v495, 7
    %v497 = vsub.s32 7, %v496
    %v498 = vrot.slane %v265, %v497
    %v499 = vlaneseq
    %v500 = vshrl.u32 %v499, 7
    %v501 = vsub.s32 0, %v500
    %v502 = vrot.slane %v267, %v501
    %v503 = vlaneseq
    %v504 = vshrl.u32 %v503, 7
    %v505 = vsub.s32 1, %v504
    %v506 = vrot.slane %v267, %v505
    %v507 = vlaneseq
    %v508 = vshrl.u32 %v507, 7
    %v509 = vsub.s32 2, %v508
    %v510 = vrot.slane %v267, %v509
    %v511 = vlaneseq
    %v512 = vshrl.u32 %v511, 7
    %v513 = vsub.s32 3, %v512
    %v514 = vrot.slane %v267, %v513
    %v515 = vlaneseq
    %v516 = vshrl.u32 %v515, 7
    %v517 = vsub.s32 4, %v516
    %v518 = vrot.slane %v267, %v517
    %v519 = vlaneseq
    %v520 = vshrl.u32 %v519, 7
    %v521 = vsub.s32 5, %v520
    %v522 = vrot.slane %v267, %v521
    %v523 = vlaneseq
    %v524 = vshrl.u32 %v523, 7
    %v525 = vsub.s32 6, %v524
    %v526 = vrot.slane %v267, %v525
    %v527 = vlaneseq
    %v528 = vshrl.u32 %v527, 7
    %v529 = vsub.s32 7, %v528
    %v530 = vrot.slane %v267, %v529
    %v531 = vlaneseq
    %v532 = vshrl.u32 %v531, 7
    %v533 = vsub.s32 0, %v532
    %v534 = vrot.slane %v269, %v533
    %v535 = vlaneseq
    %v536 = vshrl.u32 %v535, 7
    %v537 = vsub.s32 1, %v536
    %v538 = vrot.slane %v269, %v537
    %v539 = vlaneseq
    %v540 = vshrl.u32 %v539, 7
    %v541 = vsub.s32 2, %v540
    %v542 = vrot.slane %v269, %v541
    %v543 = vlaneseq
    %v544 = vshrl.u32 %v543, 7
    %v545 = vsub.s32 3, %v544
    %v546 = vrot.slane %v269, %v545
    %v547 = vlaneseq
    %v548 = vshrl.u32 %v547, 7
    %v549 = vsub.s32 4, %v548
    %v550 = vrot.slane %v269, %v549
    %v551 = vlaneseq
    %v552 = vshrl.u32 %v551, 7
    %v553 = vsub.s32 5, %v552
    %v554 = vrot.slane %v269, %v553
    %v555 = vlaneseq
    %v556 = vshrl.u32 %v555, 7
    %v557 = vsub.s32 6, %v556
    %v558 = vrot.slane %v269, %v557
    %v559 = vlaneseq
    %v560 = vshrl.u32 %v559, 7
    %v561 = vsub.s32 7, %v560
    %v562 = vrot.slane %v269, %v561
    %v563 = vlaneseq
    %v564 = vshrl.u32 %v563, 7
    %v565 = vsub.s32 0, %v564
    %v566 = vrot.slane %v271, %v565
    %v567 = vlaneseq
    %v568 = vshrl.u32 %v567, 7
    %v569 = vsub.s32 1, %v568
    %v570 = vrot.slane %v271, %v569
    %v571 = vlaneseq
    %v572 = vshrl.u32 %v571, 7
    %v573 = vsub.s32 2, %v572
    %v574 = vrot.slane %v271, %v573
    %v575 = vlaneseq
    %v576 = vshrl.u32 %v575, 7
    %v577 = vsub.s32 3, %v576
    %v578 = vrot.slane %v271, %v577
    %v579 = vlaneseq
    %v580 = vshrl.u32 %v579, 7
    %v581 = vsub.s32 4, %v580
    %v582 = vrot.slane %v271, %v581
    %v583 = vlaneseq
    %v584 = vshrl.u32 %v583, 7
    %v585 = vsub.s32 5, %v584
    %v586 = vrot.slane %v271, %v585
    %v587 = vlaneseq
    %v588 = vshrl.u32 %v587, 7
    %v589 = vsub.s32 6, %v588
    %v590 = vrot.slane %v271, %v589
    %v591 = vlaneseq
    %v592 = vshrl.u32 %v591, 7
    %v593 = vsub.s32 7, %v592
    %v594 = vrot.slane %v271, %v593
    %v595 = vlaneseq
    %v596 = vshrl.u32 %v595, 7
    %v597 = vsub.s32 0, %v596
    %v598 = vrot.slane %v273, %v597
    %v599 = vlaneseq
    %v600 = vshrl.u32 %v599, 7
    %v601 = vsub.s32 1, %v600
    %v602 = vrot.slane %v273, %v601
    %v603 = vlaneseq
    %v604 = vshrl.u32 %v603, 7
    %v605 = vsub.s32 2, %v604
    %v606 = vrot.slane %v273, %v605
    %v607 = vlaneseq
    %v608 = vshrl.u32 %v607, 7
    %v609 = vsub.s32 3, %v608
    %v610 = vrot.slane %v273, %v609
    %v611 = vlaneseq
    %v612 = vshrl.u32 %v611, 7
    %v613 = vsub.s32 4, %v612
    %v614 = vrot.slane %v273, %v613
    %v615 = vlaneseq
    %v616 = vshrl.u32 %v615, 7
    %v617 = vsub.s32 5, %v616
    %v618 = vrot.slane %v273, %v617
    %v619 = vlaneseq
    %v620 = vshrl.u32 %v619, 7
    %v621 = vsub.s32 6, %v620
    %v622 = vrot.slane %v273, %v621
    %v623 = vlaneseq
    %v624 = vshrl.u32 %v623, 7
    %v625 = vsub.s32 7, %v624
    %v626 = vrot.slane %v273, %v625
    %v627 = vcombine.low %v374, %v378
    %v628 = vcombine.low %v382, %v386
    %v629 = vcombine.low %v390, %v394
    %v630 = vcombine.low %v398, %v402
    %v632 = vunpack.c.l.s4 1966171168
    %v633 = vunpack.c.0.s8 %v632
    %v634 = vlaneseq
    %v635 = vshrl.u32 %v634, 7
    %v636 = vsub.s32 %v633, %v635
    %v637 = vrot.slane %v627, %v636
    %v639 = vunpack.c.l.s4 1966171168
    %v640 = vunpack.c.0.s8 %v639
    %v641 = vlaneseq
    %v642 = vshrl.u32 %v641, 7
    %v643 = vsub.s32 %v640, %v642
    %v644 = vrot.slane %v628, %v643
    %v646 = vunpack.c.l.s4 1966171168
    %v647 = vunpack.c.0.s8 %v646
    %v648 = vlaneseq
    %v649 = vshrl.u32 %v648, 7
    %v650 = vsub.s32 %v647, %v649
    %v651 = vrot.slane %v629, %v650
    %v653 = vunpack.c.l.s4 1966171168
    %v654 = vunpack.c.0.s8 %v653
    %v655 = vlaneseq
    %v656 = vshrl.u32 %v655, 7
    %v657 = vsub.s32 %v654, %v656
    %v658 = vrot.slane %v630, %v657
    %v659 = vcombine.low %v637, %v644
    %v660 = vcombine.low %v651, %v658
    %v662 = vunpack.c.l.s4 1966171168
    %v663 = vunpack.c.0.s8 %v662
    %v664 = vlaneseq
    %v665 = vshrl.u32 %v664, 7
    %v666 = vsub.s32 %v663, %v665
    %v667 = vrot.slane %v659, %v666
    %v669 = vunpack.c.l.s4 1966171168
    %v670 = vunpack.c.0.s8 %v669
    %v671 = vlaneseq
    %v672 = vshrl.u32 %v671, 7
    %v673 = vsub.s32 %v670, %v672
    %v674 = vrot.slane %v660, %v673
    %v675 = vcombine.low %v667, %v674
    %v676 = vcombine.low %v406, %v410
    %v677 = vcombine.low %v414, %v418
    %v678 = vcombine.low %v422, %v426
    %v679 = vcombine.low %v430, %v434
    %v681 = vunpack.c.l.s4 1966171168
    %v682 = vunpack.c.0.s8 %v681
    %v683 = vlaneseq
    %v684 = vshrl.u32 %v683, 7
    %v685 = vsub.s32 %v682, %v684
    %v686 = vrot.slane %v676, %v685
    %v688 = vunpack.c.l.s4 1966171168
    %v689 = vunpack.c.0.s8 %v688
    %v690 = vlaneseq
    %v691 = vshrl.u32 %v690, 7
    %v692 = vsub.s32 %v689, %v691
    %v693 = vrot.slane %v677, %v692
    %v695 = vunpack.c.l.s4 1966171168
    %v696 = vunpack.c.0.s8 %v695
    %v697 = vlaneseq
    %v698 = vshrl.u32 %v697, 7
    %v699 = vsub.s32 %v696, %v698
    %v700 = vrot.slane %v678, %v699
    %v702 = vunpack.c.l.s4 1966171168
    %v703 = vunpack.c.0.s8 %v702
    %v704 = vlaneseq
    %v705 = vshrl.u32 %v704, 7
    %v706 = vsub.s32 %v703, %v705
    %v707 = vrot.slane %v679, %v706
    %v708 = vcombine.low %v686, %v693
    %v709 = vcombine.low %v700, %v707
    %v711 = vunpack.c.l.s4 1966171168
    %v712 = vunpack.c.0.s8 %v711
    %v713 = vlaneseq
    %v714 = vshrl.u32 %v713, 7
    %v715 = vsub.s32 %v712, %v714
    %v716 = vrot.slane %v708, %v715
    %v718 = vunpack.c.l.s4 1966171168
    %v719 = vunpack.c.0.s8 %v718
    %v720 = vlaneseq
    %v721 = vshrl.u32 %v720, 7
    %v722 = vsub.s32 %v719, %v721
    %v723 = vrot.slane %v709, %v722
    %v724 = vcombine.low %v716, %v723
    %v725 = vcombine.low %v438, %v442
    %v726 = vcombine.low %v446, %v450
    %v727 = vcombine.low %v454, %v458
    %v728 = vcombine.low %v462, %v466
    %v730 = vunpack.c.l.s4 1966171168
    %v731 = vunpack.c.0.s8 %v730
    %v732 = vlaneseq
    %v733 = vshrl.u32 %v732, 7
    %v734 = vsub.s32 %v731, %v733
    %v735 = vrot.slane %v725, %v734
    %v737 = vunpack.c.l.s4 1966171168
    %v738 = vunpack.c.0.s8 %v737
    %v739 = vlaneseq
    %v740 = vshrl.u32 %v739, 7
    %v741 = vsub.s32 %v738, %v740
    %v742 = vrot.slane %v726, %v741
    %v744 = vunpack.c.l.s4 1966171168
    %v745 = vunpack.c.0.s8 %v744
    %v746 = vlaneseq
    %v747 = vshrl.u32 %v746, 7
    %v748 = vsub.s32 %v745, %v747
    %v749 = vrot.slane %v727, %v748
    %v751 = vunpack.c.l.s4 1966171168
    %v752 = vunpack.c.0.s8 %v751
    %v753 = vlaneseq
    %v754 = vshrl.u32 %v753, 7
    %v755 = vsub.s32 %v752, %v754
    %v756 = vrot.slane %v728, %v755
    %v757 = vcombine.low %v735, %v742
    %v758 = vcombine.low %v749, %v756
    %v760 = vunpack.c.l.s4 1966171168
    %v761 = vunpack.c.0.s8 %v760
    %v762 = vlaneseq
    %v763 = vshrl.u32 %v762, 7
    %v764 = vsub.s32 %v761, %v763
    %v765 = vrot.slane %v757, %v764
    %v767 = vunpack.c.l.s4 1966171168
    %v768 = vunpack.c.0.s8 %v767
    %v769 = vlaneseq
    %v770 = vshrl.u32 %v769, 7
    %v771 = vsub.s32 %v768, %v770
    %v772 = vrot.slane %v758, %v771
    %v773 = vcombine.low %v765, %v772
    %v774 = vcombine.low %v470, %v474
    %v775 = vcombine.low %v478, %v482
    %v776 = vcombine.low %v486, %v490
    %v777 = vcombine.low %v494, %v498
    %v779 = vunpack.c.l.s4 1966171168
    %v780 = vunpack.c.0.s8 %v779
    %v781 = vlaneseq
    %v782 = vshrl.u32 %v781, 7
    %v783 = vsub.s32 %v780, %v782
    %v784 = vrot.slane %v774, %v783
    %v786 = vunpack.c.l.s4 1966171168
    %v787 = vunpack.c.0.s8 %v786
    %v788 = vlaneseq
    %v789 = vshrl.u32 %v788, 7
    %v790 = vsub.s32 %v787, %v789
    %v791 = vrot.slane %v775, %v790
    %v793 = vunpack.c.l.s4 1966171168
    %v794 = vunpack.c.0.s8 %v793
    %v795 = vlaneseq
    %v796 = vshrl.u32 %v795, 7
    %v797 = vsub.s32 %v794, %v796
    %v798 = vrot.slane %v776, %v797
    %v800 = vunpack.c.l.s4 1966171168
    %v801 = vunpack.c.0.s8 %v800
    %v802 = vlaneseq
    %v803 = vshrl.u32 %v802, 7
    %v804 = vsub.s32 %v801, %v803
    %v805 = vrot.slane %v777, %v804
    %v806 = vcombine.low %v784, %v791
    %v807 = vcombine.low %v798, %v805
    %v809 = vunpack.c.l.s4 1966171168
    %v810 = vunpack.c.0.s8 %v809
    %v811 = vlaneseq
    %v812 = vshrl.u32 %v811, 7
    %v813 = vsub.s32 %v810, %v812
    %v814 = vrot.slane %v806, %v813
    %v816 = vunpack.c.l.s4 1966171168
    %v817 = vunpack.c.0.s8 %v816
    %v818 = vlaneseq
    %v819 = vshrl.u32 %v818, 7
    %v820 = vsub.s32 %v817, %v819
    %v821 = vrot.slane %v807, %v820
    %v822 = vcombine.low %v814, %v821
    %v823 = vcombine.low %v502, %v506
    %v824 = vcombine.low %v510, %v514
    %v825 = vcombine.low %v518, %v522
    %v826 = vcombine.low %v526, %v530
    %v828 = vunpack.c.l.s4 1966171168
    %v829 = vunpack.c.0.s8 %v828
    %v830 = vlaneseq
    %v831 = vshrl.u32 %v830, 7
    %v832 = vsub.s32 %v829, %v831
    %v833 = vrot.slane %v823, %v832
    %v835 = vunpack.c.l.s4 1966171168
    %v836 = vunpack.c.0.s8 %v835
    %v837 = vlaneseq
    %v838 = vshrl.u32 %v837, 7
    %v839 = vsub.s32 %v836, %v838
    %v840 = vrot.slane %v824, %v839
    %v842 = vunpack.c.l.s4 1966171168
    %v843 = vunpack.c.0.s8 %v842
    %v844 = vlaneseq
    %v845 = vshrl.u32 %v844, 7
    %v846 = vsub.s32 %v843, %v845
    %v847 = vrot.slane %v825, %v846
    %v849 = vunpack.c.l.s4 1966171168
    %v850 = vunpack.c.0.s8 %v849
    %v851 = vlaneseq
    %v852 = vshrl.u32 %v851, 7
    %v853 = vsub.s32 %v850, %v852
    %v854 = vrot.slane %v826, %v853
    %v855 = vcombine.low %v833, %v840
    %v856 = vcombine.low %v847, %v854
    %v858 = vunpack.c.l.s4 1966171168
    %v859 = vunpack.c.0.s8 %v858
    %v860 = vlaneseq
    %v861 = vshrl.u32 %v860, 7
    %v862 = vsub.s32 %v859, %v861
    %v863 = vrot.slane %v855, %v862
    %v865 = vunpack.c.l.s4 1966171168
    %v866 = vunpack.c.0.s8 %v865
    %v867 = vlaneseq
    %v868 = vshrl.u32 %v867, 7
    %v869 = vsub.s32 %v866, %v868
    %v870 = vrot.slane %v856, %v869
    %v871 = vcombine.low %v863, %v870
    %v872 = vcombine.low %v534, %v538
    %v873 = vcombine.low %v542, %v546
    %v874 = vcombine.low %v550, %v554
    %v875 = vcombine.low %v558, %v562
    %v877 = vunpack.c.l.s4 1966171168
    %v878 = vunpack.c.0.s8 %v877
    %v879 = vlaneseq
    %v880 = vshrl.u32 %v879, 7
    %v881 = vsub.s32 %v878, %v880
    %v882 = vrot.slane %v872, %v881
    %v884 = vunpack.c.l.s4 1966171168
    %v885 = vunpack.c.0.s8 %v884
    %v886 = vlaneseq
    %v887 = vshrl.u32 %v886, 7
    %v888 = vsub.s32 %v885, %v887
    %v889 = vrot.slane %v873, %v888
    %v891 = vunpack.c.l.s4 1966171168
    %v892 = vunpack.c.0.s8 %v891
    %v893 = vlaneseq
    %v894 = vshrl.u32 %v893, 7
    %v895 = vsub.s32 %v892, %v894
    %v896 = vrot.slane %v874, %v895
    %v898 = vunpack.c.l.s4 1966171168
    %v899 = vunpack.c.0.s8 %v898
    %v900 = vlaneseq
    %v901 = vshrl.u32 %v900, 7
    %v902 = vsub.s32 %v899, %v901
    %v903 = vrot.slane %v875, %v902
    %v904 = vcombine.low %v882, %v889
    %v905 = vcombine.low %v896, %v903
    %v907 = vunpack.c.l.s4 1966171168
    %v908 = vunpack.c.0.s8 %v907
    %v909 = vlaneseq
    %v910 = vshrl.u32 %v909, 7
    %v911 = vsub.s32 %v908, %v910
    %v912 = vrot.slane %v904, %v911
    %v914 = vunpack.c.l.s4 1966171168
    %v915 = vunpack.c.0.s8 %v914
    %v916 = vlaneseq
    %v917 = vshrl.u32 %v916, 7
    %v918 = vsub.s32 %v915, %v917
    %v919 = vrot.slane %v905, %v918
    %v920 = vcombine.low %v912, %v919
    %v921 = vcombine.low %v566, %v570
    %v922 = vcombine.low %v574, %v578
    %v923 = vcombine.low %v582, %v586
    %v924 = vcombine.low %v590, %v594
    %v926 = vunpack.c.l.s4 1966171168
    %v927 = vunpack.c.0.s8 %v926
    %v928 = vlaneseq
    %v929 = vshrl.u32 %v928, 7
    %v930 = vsub.s32 %v927, %v929
    %v931 = vrot.slane %v921, %v930
    %v933 = vunpack.c.l.s4 1966171168
    %v934 = vunpack.c.0.s8 %v933
    %v935 = vlaneseq
    %v936 = vshrl.u32 %v935, 7
    %v937 = vsub.s32 %v934, %v936
    %v938 = vrot.slane %v922, %v937
    %v940 = vunpack.c.l.s4 1966171168
    %v941 = vunpack.c.0.s8 %v940
    %v942 = vlaneseq
    %v943 = vshrl.u32 %v942, 7
    %v944 = vsub.s32 %v941, %v943
    %v945 = vrot.slane %v923, %v944
    %v947 = vunpack.c.l.s4 1966171168
    %v948 = vunpack.c.0.s8 %v947
    %v949 = vlaneseq
    %v950 = vshrl.u32 %v949, 7
    %v951 = vsub.s32 %v948, %v950
    %v952 = vrot.slane %v924, %v951
    %v953 = vcombine.low %v931, %v938
    %v954 = vcombine.low %v945, %v952
    %v956 = vunpack.c.l.s4 1966171168
    %v957 = vunpack.c.0.s8 %v956
    %v958 = vlaneseq
    %v959 = vshrl.u32 %v958, 7
    %v960 = vsub.s32 %v957, %v959
    %v961 = vrot.slane %v953, %v960
    %v963 = vunpack.c.l.s4 1966171168
    %v964 = vunpack.c.0.s8 %v963
    %v965 = vlaneseq
    %v966 = vshrl.u32 %v965, 7
    %v967 = vsub.s32 %v964, %v966
    %v968 = vrot.slane %v954, %v967
    %v969 = vcombine.low %v961, %v968
    %v970 = vcombine.low %v598, %v602
    %v971 = vcombine.low %v606, %v610
    %v972 = vcombine.low %v614, %v618
    %v973 = vcombine.low %v622, %v626
    %v975 = vunpack.c.l.s4 1966171168
    %v976 = vunpack.c.0.s8 %v975
    %v977 = vlaneseq
    %v978 = vshrl.u32 %v977, 7
    %v979 = vsub.s32 %v976, %v978
    %v980 = vrot.slane %v970, %v979
    %v982 = vunpack.c.l.s4 1966171168
    %v983 = vunpack.c.0.s8 %v982
    %v984 = vlaneseq
    %v985 = vshrl.u32 %v984, 7
    %v986 = vsub.s32 %v983, %v985
    %v987 = vrot.slane %v971, %v986
    %v989 = vunpack.c.l.s4 1966171168
    %v990 = vunpack.c.0.s8 %v989
    %v991 = vlaneseq
    %v992 = vshrl.u32 %v991, 7
    %v993 = vsub.s32 %v990, %v992
    %v994 = vrot.slane %v972, %v993
    %v996 = vunpack.c.l.s4 1966171168
    %v997 = vunpack.c.0.s8 %v996
    %v998 = vlaneseq
    %v999 = vshrl.u32 %v998, 7
    %v1000 = vsub.s32 %v997, %v999
    %v1001 = vrot.slane %v973, %v1000
    %v1002 = vcombine.low %v980, %v987
    %v1003 = vcombine.low %v994, %v1001
    %v1005 = vunpack.c.l.s4 1966171168
    %v1006 = vunpack.c.0.s8 %v1005
    %v1007 = vlaneseq
    %v1008 = vshrl.u32 %v1007, 7
    %v1009 = vsub.s32 %v1006, %v1008
    %v1010 = vrot.slane %v1002, %v1009
    %v1012 = vunpack.c.l.s4 1966171168
    %v1013 = vunpack.c.0.s8 %v1012
    %v1014 = vlaneseq
    %v1015 = vshrl.u32 %v1014, 7
    %v1016 = vsub.s32 %v1013, %v1015
    %v1017 = vrot.slane %v1003, %v1016
    %v1018 = vcombine.low %v1010, %v1017
    %1019 = vset.pattern.permute.xlu0 0
    %1020 = vperm.xlu0 %1019, %v675
    %v1021 = vpop.permute.xlu0 %1020
    %1022 = vset.pattern.permute.xlu0 0
    %1023 = vperm.xlu0 %1022, %v724
    %v1024 = vpop.permute.xlu0 %1023
    %1025 = vset.pattern.permute.xlu0 0
    %1026 = vperm.xlu0 %1025, %v773
    %v1027 = vpop.permute.xlu0 %1026
    %1028 = vset.pattern.permute.xlu0 0
    %1029 = vperm.xlu0 %1028, %v822
    %v1030 = vpop.permute.xlu0 %1029
    %1031 = vset.pattern.permute.xlu0 0
    %1032 = vperm.xlu0 %1031, %v871
    %v1033 = vpop.permute.xlu0 %1032
    %1034 = vset.pattern.permute.xlu0 0
    %1035 = vperm.xlu0 %1034, %v920
    %v1036 = vpop.permute.xlu0 %1035
    %1037 = vset.pattern.permute.xlu0 0
    %1038 = vperm.xlu0 %1037, %v969
    %v1039 = vpop.permute.xlu0 %1038
    %1040 = vset.pattern.permute.xlu0 0
    %1041 = vperm.xlu0 %1040, %v1018
    %v1042 = vpop.permute.xlu0 %1041
    %v1043 = vlaneseq
    %v1044 = vshrl.u32 %v1043, 7
    %v1045 = vsub.s32 %v201, %v1044
    %v1046 = vrot.slane %v1021, %v1045
    %v1047 = vadd.s32 %v201, 4294967288
    %v1048 = vlaneseq
    %v1049 = vshrl.u32 %v1048, 7
    %v1050 = vsub.s32 %v1047, %v1049
    %v1051 = vrot.slane %v1024, %v1050
    %vm1052 = vcmask 130112
    %v1053 = vsel %vm1052, %v1051, %v1046
    %v1054 = vadd.s32 %v201, 4294967280
    %v1055 = vlaneseq
    %v1056 = vshrl.u32 %v1055, 7
    %v1057 = vsub.s32 %v1054, %v1056
    %v1058 = vrot.slane %v1027, %v1057
    %vm1059 = vcmask 195712
    %v1060 = vsel %vm1059, %v1058, %v1053
    %v1061 = vadd.s32 %v201, 4294967272
    %v1062 = vlaneseq
    %v1063 = vshrl.u32 %v1062, 7
    %v1064 = vsub.s32 %v1061, %v1063
    %v1065 = vrot.slane %v1030, %v1064
    %vm1066 = vcmask 261312
    %v1067 = vsel %vm1066, %v1065, %v1060
    %v1068 = vadd.s32 %v201, 4294967264
    %v1069 = vlaneseq
    %v1070 = vshrl.u32 %v1069, 7
    %v1071 = vsub.s32 %v1068, %v1070
    %v1072 = vrot.slane %v1033, %v1071
    %vm1073 = vcmask 326912
    %v1074 = vsel %vm1073, %v1072, %v1067
    %v1075 = vadd.s32 %v201, 4294967256
    %v1076 = vlaneseq
    %v1077 = vshrl.u32 %v1076, 7
    %v1078 = vsub.s32 %v1075, %v1077
    %v1079 = vrot.slane %v1036, %v1078
    %vm1080 = vcmask 392512
    %v1081 = vsel %vm1080, %v1079, %v1074
    %v1082 = vadd.s32 %v201, 4294967248
    %v1083 = vlaneseq
    %v1084 = vshrl.u32 %v1083, 7
    %v1085 = vsub.s32 %v1082, %v1084
    %v1086 = vrot.slane %v1039, %v1085
    %vm1087 = vcmask 458112
    %v1088 = vsel %vm1087, %v1086, %v1081
    %v1089 = vadd.s32 %v201, 4294967240
    %v1090 = vlaneseq
    %v1091 = vshrl.u32 %v1090, 7
    %v1092 = vsub.s32 %v1089, %v1091
    %v1093 = vrot.slane %v1042, %v1092
    %vm1094 = vcmask 523712
    %v1095 = vsel %vm1094, %v1093, %v1088
    %v1097 = vunpack.c.l.s4 1966171168
    %v1098 = vunpack.c.0.s8 %v1097
    %v1099 = vlaneseq
    %v1100 = vshrl.u32 %v1099, 7
    %v1101 = vsub.s32 %v1098, %v1100
    %v1102 = vrot.slane %v1095, %v1101
    %v1104 = vunpack.c.l.s4 1966171168
    %v1105 = vunpack.c.0.s8 %v1104
    %v1106 = vlaneseq
    %v1107 = vshrl.u32 %v1106, 7
    %v1108 = vsub.s32 %v1105, %v1107
    %v1109 = vrot.slane %v1102, %v1108
    %v1111 = vmul.f32 %v362, %v1109
    %v1113 = vlaneseq
    %v1114 = vshrl.u32 %v1113, 7
    %v1115 = vsub.s32 0, %v1114
    %v1116 = vrot.slane %v359, %v1115
    %1118 = vbcast.lane.b32.xlu0 %v1116, 256
    %v1119 = vpop.permute.xlu0 %1118
    %s1121 = sor.u32 256, 8
    %1122 = vbcast.lane.b32.xlu0 %v1116, %s1121
    %v1123 = vpop.permute.xlu0 %1122
    %s1125 = sor.u32 256, 16
    %1126 = vbcast.lane.b32.xlu0 %v1116, %s1125
    %v1127 = vpop.permute.xlu0 %1126
    %s1129 = sor.u32 256, 24
    %1130 = vbcast.lane.b32.xlu0 %v1116, %s1129
    %v1131 = vpop.permute.xlu0 %1130
    %s1133 = sor.u32 256, 32
    %1134 = vbcast.lane.b32.xlu0 %v1116, %s1133
    %v1135 = vpop.permute.xlu0 %1134
    %s1137 = sor.u32 256, 40
    %1138 = vbcast.lane.b32.xlu0 %v1116, %s1137
    %v1139 = vpop.permute.xlu0 %1138
    %s1141 = sor.u32 256, 48
    %1142 = vbcast.lane.b32.xlu0 %v1116, %s1141
    %v1143 = vpop.permute.xlu0 %1142
    %s1145 = sor.u32 256, 56
    %1146 = vbcast.lane.b32.xlu0 %v1116, %s1145
    %v1147 = vpop.permute.xlu0 %1146
    %v1156 = vmul.f32 %v337, %v1119
    %v1157 = vmul.f32 %v340, %v1123
    %v1158 = vmul.f32 %v343, %v1127
    %v1159 = vmul.f32 %v346, %v1131
    %v1160 = vmul.f32 %v349, %v1135
    %v1161 = vmul.f32 %v352, %v1139
    %v1162 = vmul.f32 %v355, %v1143
    %v1163 = vmul.f32 %v358, %v1147
    %v1172 = vcombine.high %v1156, %v1156
    %v1174 = vunpack.c.l.s4 1966171168
    %v1175 = vunpack.c.0.s8 %v1174
    %v1176 = vlaneseq
    %v1177 = vshrl.u32 %v1176, 7
    %v1178 = vsub.s32 %v1175, %v1177
    %v1179 = vrot.slane %v1156, %v1178
    %v1181 = vunpack.c.l.s4 1966171168
    %v1182 = vunpack.c.0.s8 %v1181
    %v1183 = vlaneseq
    %v1184 = vshrl.u32 %v1183, 7
    %v1185 = vsub.s32 %v1182, %v1184
    %v1186 = vrot.slane %v1172, %v1185
    %v1187 = vcombine.high %v1179, %v1179
    %v1188 = vcombine.high %v1186, %v1186
    %v1190 = vunpack.c.l.s4 1966171168
    %v1191 = vunpack.c.0.s8 %v1190
    %v1192 = vlaneseq
    %v1193 = vshrl.u32 %v1192, 7
    %v1194 = vsub.s32 %v1191, %v1193
    %v1195 = vrot.slane %v1179, %v1194
    %v1197 = vunpack.c.l.s4 1966171168
    %v1198 = vunpack.c.0.s8 %v1197
    %v1199 = vlaneseq
    %v1200 = vshrl.u32 %v1199, 7
    %v1201 = vsub.s32 %v1198, %v1200
    %v1202 = vrot.slane %v1186, %v1201
    %v1204 = vunpack.c.l.s4 1966171168
    %v1205 = vunpack.c.0.s8 %v1204
    %v1206 = vlaneseq
    %v1207 = vshrl.u32 %v1206, 7
    %v1208 = vsub.s32 %v1205, %v1207
    %v1209 = vrot.slane %v1187, %v1208
    %v1211 = vunpack.c.l.s4 1966171168
    %v1212 = vunpack.c.0.s8 %v1211
    %v1213 = vlaneseq
    %v1214 = vshrl.u32 %v1213, 7
    %v1215 = vsub.s32 %v1212, %v1214
    %v1216 = vrot.slane %v1188, %v1215
    %v1217 = vcombine.high %v1195, %v1195
    %v1218 = vcombine.high %v1202, %v1202
    %v1219 = vcombine.high %v1209, %v1209
    %v1220 = vcombine.high %v1216, %v1216
    %v1221 = vcombine.high %v1157, %v1157
    %v1223 = vunpack.c.l.s4 1966171168
    %v1224 = vunpack.c.0.s8 %v1223
    %v1225 = vlaneseq
    %v1226 = vshrl.u32 %v1225, 7
    %v1227 = vsub.s32 %v1224, %v1226
    %v1228 = vrot.slane %v1157, %v1227
    %v1230 = vunpack.c.l.s4 1966171168
    %v1231 = vunpack.c.0.s8 %v1230
    %v1232 = vlaneseq
    %v1233 = vshrl.u32 %v1232, 7
    %v1234 = vsub.s32 %v1231, %v1233
    %v1235 = vrot.slane %v1221, %v1234
    %v1236 = vcombine.high %v1228, %v1228
    %v1237 = vcombine.high %v1235, %v1235
    %v1239 = vunpack.c.l.s4 1966171168
    %v1240 = vunpack.c.0.s8 %v1239
    %v1241 = vlaneseq
    %v1242 = vshrl.u32 %v1241, 7
    %v1243 = vsub.s32 %v1240, %v1242
    %v1244 = vrot.slane %v1228, %v1243
    %v1246 = vunpack.c.l.s4 1966171168
    %v1247 = vunpack.c.0.s8 %v1246
    %v1248 = vlaneseq
    %v1249 = vshrl.u32 %v1248, 7
    %v1250 = vsub.s32 %v1247, %v1249
    %v1251 = vrot.slane %v1235, %v1250
    %v1253 = vunpack.c.l.s4 1966171168
    %v1254 = vunpack.c.0.s8 %v1253
    %v1255 = vlaneseq
    %v1256 = vshrl.u32 %v1255, 7
    %v1257 = vsub.s32 %v1254, %v1256
    %v1258 = vrot.slane %v1236, %v1257
    %v1260 = vunpack.c.l.s4 1966171168
    %v1261 = vunpack.c.0.s8 %v1260
    %v1262 = vlaneseq
    %v1263 = vshrl.u32 %v1262, 7
    %v1264 = vsub.s32 %v1261, %v1263
    %v1265 = vrot.slane %v1237, %v1264
    %v1266 = vcombine.high %v1244, %v1244
    %v1267 = vcombine.high %v1251, %v1251
    %v1268 = vcombine.high %v1258, %v1258
    %v1269 = vcombine.high %v1265, %v1265
    %v1270 = vcombine.high %v1158, %v1158
    %v1272 = vunpack.c.l.s4 1966171168
    %v1273 = vunpack.c.0.s8 %v1272
    %v1274 = vlaneseq
    %v1275 = vshrl.u32 %v1274, 7
    %v1276 = vsub.s32 %v1273, %v1275
    %v1277 = vrot.slane %v1158, %v1276
    %v1279 = vunpack.c.l.s4 1966171168
    %v1280 = vunpack.c.0.s8 %v1279
    %v1281 = vlaneseq
    %v1282 = vshrl.u32 %v1281, 7
    %v1283 = vsub.s32 %v1280, %v1282
    %v1284 = vrot.slane %v1270, %v1283
    %v1285 = vcombine.high %v1277, %v1277
    %v1286 = vcombine.high %v1284, %v1284
    %v1288 = vunpack.c.l.s4 1966171168
    %v1289 = vunpack.c.0.s8 %v1288
    %v1290 = vlaneseq
    %v1291 = vshrl.u32 %v1290, 7
    %v1292 = vsub.s32 %v1289, %v1291
    %v1293 = vrot.slane %v1277, %v1292
    %v1295 = vunpack.c.l.s4 1966171168
    %v1296 = vunpack.c.0.s8 %v1295
    %v1297 = vlaneseq
    %v1298 = vshrl.u32 %v1297, 7
    %v1299 = vsub.s32 %v1296, %v1298
    %v1300 = vrot.slane %v1284, %v1299
    %v1302 = vunpack.c.l.s4 1966171168
    %v1303 = vunpack.c.0.s8 %v1302
    %v1304 = vlaneseq
    %v1305 = vshrl.u32 %v1304, 7
    %v1306 = vsub.s32 %v1303, %v1305
    %v1307 = vrot.slane %v1285, %v1306
    %v1309 = vunpack.c.l.s4 1966171168
    %v1310 = vunpack.c.0.s8 %v1309
    %v1311 = vlaneseq
    %v1312 = vshrl.u32 %v1311, 7
    %v1313 = vsub.s32 %v1310, %v1312
    %v1314 = vrot.slane %v1286, %v1313
    %v1315 = vcombine.high %v1293, %v1293
    %v1316 = vcombine.high %v1300, %v1300
    %v1317 = vcombine.high %v1307, %v1307
    %v1318 = vcombine.high %v1314, %v1314
    %v1319 = vcombine.high %v1159, %v1159
    %v1321 = vunpack.c.l.s4 1966171168
    %v1322 = vunpack.c.0.s8 %v1321
    %v1323 = vlaneseq
    %v1324 = vshrl.u32 %v1323, 7
    %v1325 = vsub.s32 %v1322, %v1324
    %v1326 = vrot.slane %v1159, %v1325
    %v1328 = vunpack.c.l.s4 1966171168
    %v1329 = vunpack.c.0.s8 %v1328
    %v1330 = vlaneseq
    %v1331 = vshrl.u32 %v1330, 7
    %v1332 = vsub.s32 %v1329, %v1331
    %v1333 = vrot.slane %v1319, %v1332
    %v1334 = vcombine.high %v1326, %v1326
    %v1335 = vcombine.high %v1333, %v1333
    %v1337 = vunpack.c.l.s4 1966171168
    %v1338 = vunpack.c.0.s8 %v1337
    %v1339 = vlaneseq
    %v1340 = vshrl.u32 %v1339, 7
    %v1341 = vsub.s32 %v1338, %v1340
    %v1342 = vrot.slane %v1326, %v1341
    %v1344 = vunpack.c.l.s4 1966171168
    %v1345 = vunpack.c.0.s8 %v1344
    %v1346 = vlaneseq
    %v1347 = vshrl.u32 %v1346, 7
    %v1348 = vsub.s32 %v1345, %v1347
    %v1349 = vrot.slane %v1333, %v1348
    %v1351 = vunpack.c.l.s4 1966171168
    %v1352 = vunpack.c.0.s8 %v1351
    %v1353 = vlaneseq
    %v1354 = vshrl.u32 %v1353, 7
    %v1355 = vsub.s32 %v1352, %v1354
    %v1356 = vrot.slane %v1334, %v1355
    %v1358 = vunpack.c.l.s4 1966171168
    %v1359 = vunpack.c.0.s8 %v1358
    %v1360 = vlaneseq
    %v1361 = vshrl.u32 %v1360, 7
    %v1362 = vsub.s32 %v1359, %v1361
    %v1363 = vrot.slane %v1335, %v1362
    %v1364 = vcombine.high %v1342, %v1342
    %v1365 = vcombine.high %v1349, %v1349
    %v1366 = vcombine.high %v1356, %v1356
    %v1367 = vcombine.high %v1363, %v1363
    %v1368 = vcombine.high %v1160, %v1160
    %v1370 = vunpack.c.l.s4 1966171168
    %v1371 = vunpack.c.0.s8 %v1370
    %v1372 = vlaneseq
    %v1373 = vshrl.u32 %v1372, 7
    %v1374 = vsub.s32 %v1371, %v1373
    %v1375 = vrot.slane %v1160, %v1374
    %v1377 = vunpack.c.l.s4 1966171168
    %v1378 = vunpack.c.0.s8 %v1377
    %v1379 = vlaneseq
    %v1380 = vshrl.u32 %v1379, 7
    %v1381 = vsub.s32 %v1378, %v1380
    %v1382 = vrot.slane %v1368, %v1381
    %v1383 = vcombine.high %v1375, %v1375
    %v1384 = vcombine.high %v1382, %v1382
    %v1386 = vunpack.c.l.s4 1966171168
    %v1387 = vunpack.c.0.s8 %v1386
    %v1388 = vlaneseq
    %v1389 = vshrl.u32 %v1388, 7
    %v1390 = vsub.s32 %v1387, %v1389
    %v1391 = vrot.slane %v1375, %v1390
    %v1393 = vunpack.c.l.s4 1966171168
    %v1394 = vunpack.c.0.s8 %v1393
    %v1395 = vlaneseq
    %v1396 = vshrl.u32 %v1395, 7
    %v1397 = vsub.s32 %v1394, %v1396
    %v1398 = vrot.slane %v1382, %v1397
    %v1400 = vunpack.c.l.s4 1966171168
    %v1401 = vunpack.c.0.s8 %v1400
    %v1402 = vlaneseq
    %v1403 = vshrl.u32 %v1402, 7
    %v1404 = vsub.s32 %v1401, %v1403
    %v1405 = vrot.slane %v1383, %v1404
    %v1407 = vunpack.c.l.s4 1966171168
    %v1408 = vunpack.c.0.s8 %v1407
    %v1409 = vlaneseq
    %v1410 = vshrl.u32 %v1409, 7
    %v1411 = vsub.s32 %v1408, %v1410
    %v1412 = vrot.slane %v1384, %v1411
    %v1413 = vcombine.high %v1391, %v1391
    %v1414 = vcombine.high %v1398, %v1398
    %v1415 = vcombine.high %v1405, %v1405
    %v1416 = vcombine.high %v1412, %v1412
    %v1417 = vcombine.high %v1161, %v1161
    %v1419 = vunpack.c.l.s4 1966171168
    %v1420 = vunpack.c.0.s8 %v1419
    %v1421 = vlaneseq
    %v1422 = vshrl.u32 %v1421, 7
    %v1423 = vsub.s32 %v1420, %v1422
    %v1424 = vrot.slane %v1161, %v1423
    %v1426 = vunpack.c.l.s4 1966171168
    %v1427 = vunpack.c.0.s8 %v1426
    %v1428 = vlaneseq
    %v1429 = vshrl.u32 %v1428, 7
    %v1430 = vsub.s32 %v1427, %v1429
    %v1431 = vrot.slane %v1417, %v1430
    %v1432 = vcombine.high %v1424, %v1424
    %v1433 = vcombine.high %v1431, %v1431
    %v1435 = vunpack.c.l.s4 1966171168
    %v1436 = vunpack.c.0.s8 %v1435
    %v1437 = vlaneseq
    %v1438 = vshrl.u32 %v1437, 7
    %v1439 = vsub.s32 %v1436, %v1438
    %v1440 = vrot.slane %v1424, %v1439
    %v1442 = vunpack.c.l.s4 1966171168
    %v1443 = vunpack.c.0.s8 %v1442
    %v1444 = vlaneseq
    %v1445 = vshrl.u32 %v1444, 7
    %v1446 = vsub.s32 %v1443, %v1445
    %v1447 = vrot.slane %v1431, %v1446
    %v1449 = vunpack.c.l.s4 1966171168
    %v1450 = vunpack.c.0.s8 %v1449
    %v1451 = vlaneseq
    %v1452 = vshrl.u32 %v1451, 7
    %v1453 = vsub.s32 %v1450, %v1452
    %v1454 = vrot.slane %v1432, %v1453
    %v1456 = vunpack.c.l.s4 1966171168
    %v1457 = vunpack.c.0.s8 %v1456
    %v1458 = vlaneseq
    %v1459 = vshrl.u32 %v1458, 7
    %v1460 = vsub.s32 %v1457, %v1459
    %v1461 = vrot.slane %v1433, %v1460
    %v1462 = vcombine.high %v1440, %v1440
    %v1463 = vcombine.high %v1447, %v1447
    %v1464 = vcombine.high %v1454, %v1454
    %v1465 = vcombine.high %v1461, %v1461
    %v1466 = vcombine.high %v1162, %v1162
    %v1468 = vunpack.c.l.s4 1966171168
    %v1469 = vunpack.c.0.s8 %v1468
    %v1470 = vlaneseq
    %v1471 = vshrl.u32 %v1470, 7
    %v1472 = vsub.s32 %v1469, %v1471
    %v1473 = vrot.slane %v1162, %v1472
    %v1475 = vunpack.c.l.s4 1966171168
    %v1476 = vunpack.c.0.s8 %v1475
    %v1477 = vlaneseq
    %v1478 = vshrl.u32 %v1477, 7
    %v1479 = vsub.s32 %v1476, %v1478
    %v1480 = vrot.slane %v1466, %v1479
    %v1481 = vcombine.high %v1473, %v1473
    %v1482 = vcombine.high %v1480, %v1480
    %v1484 = vunpack.c.l.s4 1966171168
    %v1485 = vunpack.c.0.s8 %v1484
    %v1486 = vlaneseq
    %v1487 = vshrl.u32 %v1486, 7
    %v1488 = vsub.s32 %v1485, %v1487
    %v1489 = vrot.slane %v1473, %v1488
    %v1491 = vunpack.c.l.s4 1966171168
    %v1492 = vunpack.c.0.s8 %v1491
    %v1493 = vlaneseq
    %v1494 = vshrl.u32 %v1493, 7
    %v1495 = vsub.s32 %v1492, %v1494
    %v1496 = vrot.slane %v1480, %v1495
    %v1498 = vunpack.c.l.s4 1966171168
    %v1499 = vunpack.c.0.s8 %v1498
    %v1500 = vlaneseq
    %v1501 = vshrl.u32 %v1500, 7
    %v1502 = vsub.s32 %v1499, %v1501
    %v1503 = vrot.slane %v1481, %v1502
    %v1505 = vunpack.c.l.s4 1966171168
    %v1506 = vunpack.c.0.s8 %v1505
    %v1507 = vlaneseq
    %v1508 = vshrl.u32 %v1507, 7
    %v1509 = vsub.s32 %v1506, %v1508
    %v1510 = vrot.slane %v1482, %v1509
    %v1511 = vcombine.high %v1489, %v1489
    %v1512 = vcombine.high %v1496, %v1496
    %v1513 = vcombine.high %v1503, %v1503
    %v1514 = vcombine.high %v1510, %v1510
    %v1515 = vcombine.high %v1163, %v1163
    %v1517 = vunpack.c.l.s4 1966171168
    %v1518 = vunpack.c.0.s8 %v1517
    %v1519 = vlaneseq
    %v1520 = vshrl.u32 %v1519, 7
    %v1521 = vsub.s32 %v1518, %v1520
    %v1522 = vrot.slane %v1163, %v1521
    %v1524 = vunpack.c.l.s4 1966171168
    %v1525 = vunpack.c.0.s8 %v1524
    %v1526 = vlaneseq
    %v1527 = vshrl.u32 %v1526, 7
    %v1528 = vsub.s32 %v1525, %v1527
    %v1529 = vrot.slane %v1515, %v1528
    %v1530 = vcombine.high %v1522, %v1522
    %v1531 = vcombine.high %v1529, %v1529
    %v1533 = vunpack.c.l.s4 1966171168
    %v1534 = vunpack.c.0.s8 %v1533
    %v1535 = vlaneseq
    %v1536 = vshrl.u32 %v1535, 7
    %v1537 = vsub.s32 %v1534, %v1536
    %v1538 = vrot.slane %v1522, %v1537
    %v1540 = vunpack.c.l.s4 1966171168
    %v1541 = vunpack.c.0.s8 %v1540
    %v1542 = vlaneseq
    %v1543 = vshrl.u32 %v1542, 7
    %v1544 = vsub.s32 %v1541, %v1543
    %v1545 = vrot.slane %v1529, %v1544
    %v1547 = vunpack.c.l.s4 1966171168
    %v1548 = vunpack.c.0.s8 %v1547
    %v1549 = vlaneseq
    %v1550 = vshrl.u32 %v1549, 7
    %v1551 = vsub.s32 %v1548, %v1550
    %v1552 = vrot.slane %v1530, %v1551
    %v1554 = vunpack.c.l.s4 1966171168
    %v1555 = vunpack.c.0.s8 %v1554
    %v1556 = vlaneseq
    %v1557 = vshrl.u32 %v1556, 7
    %v1558 = vsub.s32 %v1555, %v1557
    %v1559 = vrot.slane %v1531, %v1558
    %v1560 = vcombine.high %v1538, %v1538
    %v1561 = vcombine.high %v1545, %v1545
    %v1562 = vcombine.high %v1552, %v1552
    %v1563 = vcombine.high %v1559, %v1559
    %v1564 = vcombine.low %v1195, %v1209
    %v1565 = vcombine.low %v1217, %v1219
    %v1566 = vcombine.low %v1202, %v1216
    %v1567 = vcombine.low %v1218, %v1220
    %v1569 = vunpack.c.l.s4 1966171168
    %v1570 = vunpack.c.0.s8 %v1569
    %v1571 = vlaneseq
    %v1572 = vshrl.u32 %v1571, 7
    %v1573 = vsub.s32 %v1570, %v1572
    %v1574 = vrot.slane %v1564, %v1573
    %v1576 = vunpack.c.l.s4 1966171168
    %v1577 = vunpack.c.0.s8 %v1576
    %v1578 = vlaneseq
    %v1579 = vshrl.u32 %v1578, 7
    %v1580 = vsub.s32 %v1577, %v1579
    %v1581 = vrot.slane %v1565, %v1580
    %v1583 = vunpack.c.l.s4 1966171168
    %v1584 = vunpack.c.0.s8 %v1583
    %v1585 = vlaneseq
    %v1586 = vshrl.u32 %v1585, 7
    %v1587 = vsub.s32 %v1584, %v1586
    %v1588 = vrot.slane %v1566, %v1587
    %v1590 = vunpack.c.l.s4 1966171168
    %v1591 = vunpack.c.0.s8 %v1590
    %v1592 = vlaneseq
    %v1593 = vshrl.u32 %v1592, 7
    %v1594 = vsub.s32 %v1591, %v1593
    %v1595 = vrot.slane %v1567, %v1594
    %v1596 = vcombine.low %v1574, %v1581
    %v1597 = vcombine.low %v1588, %v1595
    %v1599 = vunpack.c.l.s4 1966171168
    %v1600 = vunpack.c.0.s8 %v1599
    %v1601 = vlaneseq
    %v1602 = vshrl.u32 %v1601, 7
    %v1603 = vsub.s32 %v1600, %v1602
    %v1604 = vrot.slane %v1596, %v1603
    %v1606 = vunpack.c.l.s4 1966171168
    %v1607 = vunpack.c.0.s8 %v1606
    %v1608 = vlaneseq
    %v1609 = vshrl.u32 %v1608, 7
    %v1610 = vsub.s32 %v1607, %v1609
    %v1611 = vrot.slane %v1597, %v1610
    %v1612 = vcombine.low %v1604, %v1611
    %v1613 = vcombine.low %v1244, %v1258
    %v1614 = vcombine.low %v1266, %v1268
    %v1615 = vcombine.low %v1251, %v1265
    %v1616 = vcombine.low %v1267, %v1269
    %v1618 = vunpack.c.l.s4 1966171168
    %v1619 = vunpack.c.0.s8 %v1618
    %v1620 = vlaneseq
    %v1621 = vshrl.u32 %v1620, 7
    %v1622 = vsub.s32 %v1619, %v1621
    %v1623 = vrot.slane %v1613, %v1622
    %v1625 = vunpack.c.l.s4 1966171168
    %v1626 = vunpack.c.0.s8 %v1625
    %v1627 = vlaneseq
    %v1628 = vshrl.u32 %v1627, 7
    %v1629 = vsub.s32 %v1626, %v1628
    %v1630 = vrot.slane %v1614, %v1629
    %v1632 = vunpack.c.l.s4 1966171168
    %v1633 = vunpack.c.0.s8 %v1632
    %v1634 = vlaneseq
    %v1635 = vshrl.u32 %v1634, 7
    %v1636 = vsub.s32 %v1633, %v1635
    %v1637 = vrot.slane %v1615, %v1636
    %v1639 = vunpack.c.l.s4 1966171168
    %v1640 = vunpack.c.0.s8 %v1639
    %v1641 = vlaneseq
    %v1642 = vshrl.u32 %v1641, 7
    %v1643 = vsub.s32 %v1640, %v1642
    %v1644 = vrot.slane %v1616, %v1643
    %v1645 = vcombine.low %v1623, %v1630
    %v1646 = vcombine.low %v1637, %v1644
    %v1648 = vunpack.c.l.s4 1966171168
    %v1649 = vunpack.c.0.s8 %v1648
    %v1650 = vlaneseq
    %v1651 = vshrl.u32 %v1650, 7
    %v1652 = vsub.s32 %v1649, %v1651
    %v1653 = vrot.slane %v1645, %v1652
    %v1655 = vunpack.c.l.s4 1966171168
    %v1656 = vunpack.c.0.s8 %v1655
    %v1657 = vlaneseq
    %v1658 = vshrl.u32 %v1657, 7
    %v1659 = vsub.s32 %v1656, %v1658
    %v1660 = vrot.slane %v1646, %v1659
    %v1661 = vcombine.low %v1653, %v1660
    %v1662 = vcombine.low %v1293, %v1307
    %v1663 = vcombine.low %v1315, %v1317
    %v1664 = vcombine.low %v1300, %v1314
    %v1665 = vcombine.low %v1316, %v1318
    %v1667 = vunpack.c.l.s4 1966171168
    %v1668 = vunpack.c.0.s8 %v1667
    %v1669 = vlaneseq
    %v1670 = vshrl.u32 %v1669, 7
    %v1671 = vsub.s32 %v1668, %v1670
    %v1672 = vrot.slane %v1662, %v1671
    %v1674 = vunpack.c.l.s4 1966171168
    %v1675 = vunpack.c.0.s8 %v1674
    %v1676 = vlaneseq
    %v1677 = vshrl.u32 %v1676, 7
    %v1678 = vsub.s32 %v1675, %v1677
    %v1679 = vrot.slane %v1663, %v1678
    %v1681 = vunpack.c.l.s4 1966171168
    %v1682 = vunpack.c.0.s8 %v1681
    %v1683 = vlaneseq
    %v1684 = vshrl.u32 %v1683, 7
    %v1685 = vsub.s32 %v1682, %v1684
    %v1686 = vrot.slane %v1664, %v1685
    %v1688 = vunpack.c.l.s4 1966171168
    %v1689 = vunpack.c.0.s8 %v1688
    %v1690 = vlaneseq
    %v1691 = vshrl.u32 %v1690, 7
    %v1692 = vsub.s32 %v1689, %v1691
    %v1693 = vrot.slane %v1665, %v1692
    %v1694 = vcombine.low %v1672, %v1679
    %v1695 = vcombine.low %v1686, %v1693
    %v1697 = vunpack.c.l.s4 1966171168
    %v1698 = vunpack.c.0.s8 %v1697
    %v1699 = vlaneseq
    %v1700 = vshrl.u32 %v1699, 7
    %v1701 = vsub.s32 %v1698, %v1700
    %v1702 = vrot.slane %v1694, %v1701
    %v1704 = vunpack.c.l.s4 1966171168
    %v1705 = vunpack.c.0.s8 %v1704
    %v1706 = vlaneseq
    %v1707 = vshrl.u32 %v1706, 7
    %v1708 = vsub.s32 %v1705, %v1707
    %v1709 = vrot.slane %v1695, %v1708
    %v1710 = vcombine.low %v1702, %v1709
    %v1711 = vcombine.low %v1342, %v1356
    %v1712 = vcombine.low %v1364, %v1366
    %v1713 = vcombine.low %v1349, %v1363
    %v1714 = vcombine.low %v1365, %v1367
    %v1716 = vunpack.c.l.s4 1966171168
    %v1717 = vunpack.c.0.s8 %v1716
    %v1718 = vlaneseq
    %v1719 = vshrl.u32 %v1718, 7
    %v1720 = vsub.s32 %v1717, %v1719
    %v1721 = vrot.slane %v1711, %v1720
    %v1723 = vunpack.c.l.s4 1966171168
    %v1724 = vunpack.c.0.s8 %v1723
    %v1725 = vlaneseq
    %v1726 = vshrl.u32 %v1725, 7
    %v1727 = vsub.s32 %v1724, %v1726
    %v1728 = vrot.slane %v1712, %v1727
    %v1730 = vunpack.c.l.s4 1966171168
    %v1731 = vunpack.c.0.s8 %v1730
    %v1732 = vlaneseq
    %v1733 = vshrl.u32 %v1732, 7
    %v1734 = vsub.s32 %v1731, %v1733
    %v1735 = vrot.slane %v1713, %v1734
    %v1737 = vunpack.c.l.s4 1966171168
    %v1738 = vunpack.c.0.s8 %v1737
    %v1739 = vlaneseq
    %v1740 = vshrl.u32 %v1739, 7
    %v1741 = vsub.s32 %v1738, %v1740
    %v1742 = vrot.slane %v1714, %v1741
    %v1743 = vcombine.low %v1721, %v1728
    %v1744 = vcombine.low %v1735, %v1742
    %v1746 = vunpack.c.l.s4 1966171168
    %v1747 = vunpack.c.0.s8 %v1746
    %v1748 = vlaneseq
    %v1749 = vshrl.u32 %v1748, 7
    %v1750 = vsub.s32 %v1747, %v1749
    %v1751 = vrot.slane %v1743, %v1750
    %v1753 = vunpack.c.l.s4 1966171168
    %v1754 = vunpack.c.0.s8 %v1753
    %v1755 = vlaneseq
    %v1756 = vshrl.u32 %v1755, 7
    %v1757 = vsub.s32 %v1754, %v1756
    %v1758 = vrot.slane %v1744, %v1757
    %v1759 = vcombine.low %v1751, %v1758
    %v1760 = vcombine.low %v1391, %v1405
    %v1761 = vcombine.low %v1413, %v1415
    %v1762 = vcombine.low %v1398, %v1412
    %v1763 = vcombine.low %v1414, %v1416
    %v1765 = vunpack.c.l.s4 1966171168
    %v1766 = vunpack.c.0.s8 %v1765
    %v1767 = vlaneseq
    %v1768 = vshrl.u32 %v1767, 7
    %v1769 = vsub.s32 %v1766, %v1768
    %v1770 = vrot.slane %v1760, %v1769
    %v1772 = vunpack.c.l.s4 1966171168
    %v1773 = vunpack.c.0.s8 %v1772
    %v1774 = vlaneseq
    %v1775 = vshrl.u32 %v1774, 7
    %v1776 = vsub.s32 %v1773, %v1775
    %v1777 = vrot.slane %v1761, %v1776
    %v1779 = vunpack.c.l.s4 1966171168
    %v1780 = vunpack.c.0.s8 %v1779
    %v1781 = vlaneseq
    %v1782 = vshrl.u32 %v1781, 7
    %v1783 = vsub.s32 %v1780, %v1782
    %v1784 = vrot.slane %v1762, %v1783
    %v1786 = vunpack.c.l.s4 1966171168
    %v1787 = vunpack.c.0.s8 %v1786
    %v1788 = vlaneseq
    %v1789 = vshrl.u32 %v1788, 7
    %v1790 = vsub.s32 %v1787, %v1789
    %v1791 = vrot.slane %v1763, %v1790
    %v1792 = vcombine.low %v1770, %v1777
    %v1793 = vcombine.low %v1784, %v1791
    %v1795 = vunpack.c.l.s4 1966171168
    %v1796 = vunpack.c.0.s8 %v1795
    %v1797 = vlaneseq
    %v1798 = vshrl.u32 %v1797, 7
    %v1799 = vsub.s32 %v1796, %v1798
    %v1800 = vrot.slane %v1792, %v1799
    %v1802 = vunpack.c.l.s4 1966171168
    %v1803 = vunpack.c.0.s8 %v1802
    %v1804 = vlaneseq
    %v1805 = vshrl.u32 %v1804, 7
    %v1806 = vsub.s32 %v1803, %v1805
    %v1807 = vrot.slane %v1793, %v1806
    %v1808 = vcombine.low %v1800, %v1807
    %v1809 = vcombine.low %v1440, %v1454
    %v1810 = vcombine.low %v1462, %v1464
    %v1811 = vcombine.low %v1447, %v1461
    %v1812 = vcombine.low %v1463, %v1465
    %v1814 = vunpack.c.l.s4 1966171168
    %v1815 = vunpack.c.0.s8 %v1814
    %v1816 = vlaneseq
    %v1817 = vshrl.u32 %v1816, 7
    %v1818 = vsub.s32 %v1815, %v1817
    %v1819 = vrot.slane %v1809, %v1818
    %v1821 = vunpack.c.l.s4 1966171168
    %v1822 = vunpack.c.0.s8 %v1821
    %v1823 = vlaneseq
    %v1824 = vshrl.u32 %v1823, 7
    %v1825 = vsub.s32 %v1822, %v1824
    %v1826 = vrot.slane %v1810, %v1825
    %v1828 = vunpack.c.l.s4 1966171168
    %v1829 = vunpack.c.0.s8 %v1828
    %v1830 = vlaneseq
    %v1831 = vshrl.u32 %v1830, 7
    %v1832 = vsub.s32 %v1829, %v1831
    %v1833 = vrot.slane %v1811, %v1832
    %v1835 = vunpack.c.l.s4 1966171168
    %v1836 = vunpack.c.0.s8 %v1835
    %v1837 = vlaneseq
    %v1838 = vshrl.u32 %v1837, 7
    %v1839 = vsub.s32 %v1836, %v1838
    %v1840 = vrot.slane %v1812, %v1839
    %v1841 = vcombine.low %v1819, %v1826
    %v1842 = vcombine.low %v1833, %v1840
    %v1844 = vunpack.c.l.s4 1966171168
    %v1845 = vunpack.c.0.s8 %v1844
    %v1846 = vlaneseq
    %v1847 = vshrl.u32 %v1846, 7
    %v1848 = vsub.s32 %v1845, %v1847
    %v1849 = vrot.slane %v1841, %v1848
    %v1851 = vunpack.c.l.s4 1966171168
    %v1852 = vunpack.c.0.s8 %v1851
    %v1853 = vlaneseq
    %v1854 = vshrl.u32 %v1853, 7
    %v1855 = vsub.s32 %v1852, %v1854
    %v1856 = vrot.slane %v1842, %v1855
    %v1857 = vcombine.low %v1849, %v1856
    %v1858 = vcombine.low %v1489, %v1503
    %v1859 = vcombine.low %v1511, %v1513
    %v1860 = vcombine.low %v1496, %v1510
    %v1861 = vcombine.low %v1512, %v1514
    %v1863 = vunpack.c.l.s4 1966171168
    %v1864 = vunpack.c.0.s8 %v1863
    %v1865 = vlaneseq
    %v1866 = vshrl.u32 %v1865, 7
    %v1867 = vsub.s32 %v1864, %v1866
    %v1868 = vrot.slane %v1858, %v1867
    %v1870 = vunpack.c.l.s4 1966171168
    %v1871 = vunpack.c.0.s8 %v1870
    %v1872 = vlaneseq
    %v1873 = vshrl.u32 %v1872, 7
    %v1874 = vsub.s32 %v1871, %v1873
    %v1875 = vrot.slane %v1859, %v1874
    %v1877 = vunpack.c.l.s4 1966171168
    %v1878 = vunpack.c.0.s8 %v1877
    %v1879 = vlaneseq
    %v1880 = vshrl.u32 %v1879, 7
    %v1881 = vsub.s32 %v1878, %v1880
    %v1882 = vrot.slane %v1860, %v1881
    %v1884 = vunpack.c.l.s4 1966171168
    %v1885 = vunpack.c.0.s8 %v1884
    %v1886 = vlaneseq
    %v1887 = vshrl.u32 %v1886, 7
    %v1888 = vsub.s32 %v1885, %v1887
    %v1889 = vrot.slane %v1861, %v1888
    %v1890 = vcombine.low %v1868, %v1875
    %v1891 = vcombine.low %v1882, %v1889
    %v1893 = vunpack.c.l.s4 1966171168
    %v1894 = vunpack.c.0.s8 %v1893
    %v1895 = vlaneseq
    %v1896 = vshrl.u32 %v1895, 7
    %v1897 = vsub.s32 %v1894, %v1896
    %v1898 = vrot.slane %v1890, %v1897
    %v1900 = vunpack.c.l.s4 1966171168
    %v1901 = vunpack.c.0.s8 %v1900
    %v1902 = vlaneseq
    %v1903 = vshrl.u32 %v1902, 7
    %v1904 = vsub.s32 %v1901, %v1903
    %v1905 = vrot.slane %v1891, %v1904
    %v1906 = vcombine.low %v1898, %v1905
    %v1907 = vcombine.low %v1538, %v1552
    %v1908 = vcombine.low %v1560, %v1562
    %v1909 = vcombine.low %v1545, %v1559
    %v1910 = vcombine.low %v1561, %v1563
    %v1912 = vunpack.c.l.s4 1966171168
    %v1913 = vunpack.c.0.s8 %v1912
    %v1914 = vlaneseq
    %v1915 = vshrl.u32 %v1914, 7
    %v1916 = vsub.s32 %v1913, %v1915
    %v1917 = vrot.slane %v1907, %v1916
    %v1919 = vunpack.c.l.s4 1966171168
    %v1920 = vunpack.c.0.s8 %v1919
    %v1921 = vlaneseq
    %v1922 = vshrl.u32 %v1921, 7
    %v1923 = vsub.s32 %v1920, %v1922
    %v1924 = vrot.slane %v1908, %v1923
    %v1926 = vunpack.c.l.s4 1966171168
    %v1927 = vunpack.c.0.s8 %v1926
    %v1928 = vlaneseq
    %v1929 = vshrl.u32 %v1928, 7
    %v1930 = vsub.s32 %v1927, %v1929
    %v1931 = vrot.slane %v1909, %v1930
    %v1933 = vunpack.c.l.s4 1966171168
    %v1934 = vunpack.c.0.s8 %v1933
    %v1935 = vlaneseq
    %v1936 = vshrl.u32 %v1935, 7
    %v1937 = vsub.s32 %v1934, %v1936
    %v1938 = vrot.slane %v1910, %v1937
    %v1939 = vcombine.low %v1917, %v1924
    %v1940 = vcombine.low %v1931, %v1938
    %v1942 = vunpack.c.l.s4 1966171168
    %v1943 = vunpack.c.0.s8 %v1942
    %v1944 = vlaneseq
    %v1945 = vshrl.u32 %v1944, 7
    %v1946 = vsub.s32 %v1943, %v1945
    %v1947 = vrot.slane %v1939, %v1946
    %v1949 = vunpack.c.l.s4 1966171168
    %v1950 = vunpack.c.0.s8 %v1949
    %v1951 = vlaneseq
    %v1952 = vshrl.u32 %v1951, 7
    %v1953 = vsub.s32 %v1950, %v1952
    %v1954 = vrot.slane %v1940, %v1953
    %v1955 = vcombine.low %v1947, %v1954
    %1956 = vset.pattern.permute.xlu0 0
    %1957 = vperm.xlu0 %1956, %v1612
    %v1958 = vpop.permute.xlu0 %1957
    %1959 = vset.pattern.permute.xlu0 0
    %1960 = vperm.xlu0 %1959, %v1661
    %v1961 = vpop.permute.xlu0 %1960
    %1962 = vset.pattern.permute.xlu0 0
    %1963 = vperm.xlu0 %1962, %v1710
    %v1964 = vpop.permute.xlu0 %1963
    %1965 = vset.pattern.permute.xlu0 0
    %1966 = vperm.xlu0 %1965, %v1759
    %v1967 = vpop.permute.xlu0 %1966
    %1968 = vset.pattern.permute.xlu0 0
    %1969 = vperm.xlu0 %1968, %v1808
    %v1970 = vpop.permute.xlu0 %1969
    %1971 = vset.pattern.permute.xlu0 0
    %1972 = vperm.xlu0 %1971, %v1857
    %v1973 = vpop.permute.xlu0 %1972
    %1974 = vset.pattern.permute.xlu0 0
    %1975 = vperm.xlu0 %1974, %v1906
    %v1976 = vpop.permute.xlu0 %1975
    %1977 = vset.pattern.permute.xlu0 0
    %1978 = vperm.xlu0 %1977, %v1955
    %v1979 = vpop.permute.xlu0 %1978
    %v1980 = vlaneseq
    %v1981 = vshrl.u32 %v1980, 7
    %v1982 = vsub.s32 %v201, %v1981
    %v1983 = vrot.slane %v1958, %v1982
    %v1984 = vlaneseq
    %v1985 = vshrl.u32 %v1984, 7
    %v1986 = vsub.s32 %v1047, %v1985
    %v1987 = vrot.slane %v1961, %v1986
    %v1988 = vsel %vm1052, %v1987, %v1983
    %v1989 = vlaneseq
    %v1990 = vshrl.u32 %v1989, 7
    %v1991 = vsub.s32 %v1054, %v1990
    %v1992 = vrot.slane %v1964, %v1991
    %v1993 = vsel %vm1059, %v1992, %v1988
    %v1994 = vlaneseq
    %v1995 = vshrl.u32 %v1994, 7
    %v1996 = vsub.s32 %v1061, %v1995
    %v1997 = vrot.slane %v1967, %v1996
    %v1998 = vsel %vm1066, %v1997, %v1993
    %v1999 = vlaneseq
    %v2000 = vshrl.u32 %v1999, 7
    %v2001 = vsub.s32 %v1068, %v2000
    %v2002 = vrot.slane %v1970, %v2001
    %v2003 = vsel %vm1073, %v2002, %v1998
    %v2004 = vlaneseq
    %v2005 = vshrl.u32 %v2004, 7
    %v2006 = vsub.s32 %v1075, %v2005
    %v2007 = vrot.slane %v1973, %v2006
    %v2008 = vsel %vm1080, %v2007, %v2003
    %v2009 = vlaneseq
    %v2010 = vshrl.u32 %v2009, 7
    %v2011 = vsub.s32 %v1082, %v2010
    %v2012 = vrot.slane %v1976, %v2011
    %v2013 = vsel %vm1087, %v2012, %v2008
    %v2014 = vlaneseq
    %v2015 = vshrl.u32 %v2014, 7
    %v2016 = vsub.s32 %v1089, %v2015
    %v2017 = vrot.slane %v1979, %v2016
    %v2018 = vsel %vm1094, %v2017, %v2013
    %v2020 = vunpack.c.l.s4 1966171168
    %v2021 = vunpack.c.0.s8 %v2020
    %v2022 = vlaneseq
    %v2023 = vshrl.u32 %v2022, 7
    %v2024 = vsub.s32 %v2021, %v2023
    %v2025 = vrot.slane %v2018, %v2024
    %v2027 = vunpack.c.l.s4 1966171168
    %v2028 = vunpack.c.0.s8 %v2027
    %v2029 = vlaneseq
    %v2030 = vshrl.u32 %v2029, 7
    %v2031 = vsub.s32 %v2028, %v2030
    %v2032 = vrot.slane %v2025, %v2031
    %v2034 = vsub.f32 %v1111, %v2032
    %vm2035 = vcmask 516096
    %2036 = vst.msk [vmem:[#allocation2] sm:$0x1] %vm2035, %v2034
    // Predicated region
    $region18: #{tpu_custom_call.1} parent=1 // pred_check
      _
    $region19: #{tpu_custom_call.1} parent=1 // pred_check_branch
      %2038 = sbr.rel (0) target = $region21
    $region20: #{tpu_custom_call.1} parent=1 // pred_region
      %s2040 = ssub.s32 16, 16
      %2041 = vsyncadd [#allocation3], %s2040
      %s2043 = sshll.u32 [#allocation2], 4
      %s2044 = int_to_ptr.vmem [resolvable:$true] %s2043
      %2046 = dma.vmem_to_hbm [thread:$0]  %s2044, 16, %s4, [#allocation3]
    $region21: #{tpu_custom_call.1} parent=1 // pred_fallthru
      _
    // Predicated region
    $region22: #{tpu_custom_call.1} parent=1 // pred_check
      _
    $region23: #{tpu_custom_call.1} parent=1 // pred_check_branch
      %2048 = sbr.rel (0) target = $region25
    $region24: #{tpu_custom_call.1} parent=1 // pred_region
      %2049 = dma.done [#allocation3], 16
    $region25: #{tpu_custom_call.1} parent=1 // pred_fallthru
      _
    %2050 = vsyncpa [#allocation3], 1

</llo_original>
